<compile_context>
chip_gen: v7x
topology: tpu7x:2x2x1
jax: 0.10.0
libtpu: 0.0.40
codegen_flags: <defaults>
</compile_context>

<pallas_src>
import math
import functools

import jax
import jax.numpy as jnp
from jax.experimental import pallas as pl
from jax.experimental.pallas import tpu as pltpu  # noqa: F401  (TPU backend)

# --- hyperparameters (module-level globals, mirroring the PyTorch script) ---
input_dim = 32
dim_q = 32
dim_k = 32
dim_v = 32
heads_num = 4
hidden_dim = 64
p_drop = 0.1          # dropout probability (identity at eval time)
pad = 0


# ----------------------------- Pallas kernels ------------------------------

def qkv_attn_kernel(xrep_ref, wqkv_ref, bqkv_ref, o_ref, *,
                    scale, heads, dh, seq, nblk):
    """Fused QKV projection + multi-head attention (all blocks in one body).

    xrep_ref : (nblk*seq, D)   row-replicated activations: row m*seq+s holds the
               x row feeding position s of attention block m.
    wqkv_ref : (D, 3*heads*dh) concatenated [Wq | Wk | Wv].
    bqkv_ref : (1, 3*heads*dh) concatenated biases.
    o_ref    : (nblk*seq, dh)  per-block attention outputs, stacked.
    """
    xrep = xrep_ref[...]
    # One wide MXU issue for Q, K and V together (N = 96 instead of 3x N = 32).
    qkv = (jnp.dot(xrep, wqkv_ref[...], preferred_element_type=jnp.float32)
           + bqkv_ref[...])

    rows = xrep.shape[0]
    dtot = heads * dh
    # Head group of each row: g = row % heads (valid because heads | seq).
    g_ids = jax.lax.broadcasted_iota(jnp.int32, (rows, 1), 0) % heads

    def select(full):
        # Pick columns [g*dh, (g+1)*dh) of `full` for each row's head group g.
        out = jnp.zeros((rows, dh), jnp.float32)
        for g in range(heads):
            out = jnp.where(g_ids == g, full[:, g * dh:(g + 1) * dh], out)
        return out

    q = select(qkv[:, 0:dtot])
    k = select(qkv[:, dtot:2 * dtot])
    v = select(qkv[:, 2 * dtot:3 * dtot])

    # All heads*batch attention blocks, statically unrolled in one kernel body
    # (no sequential grid, no per-step launch overhead, no lane-sparse DMAs).
    for m in range(nblk):
        qm = q[m * seq:(m + 1) * seq, :]
        km = k[m * seq:(m + 1) * seq, :]
        vm = v[m * seq:(m + 1) * seq, :]
        # q @ k^T with the transpose folded into the MXU operand feed.
        s = jax.lax.dot_general(qm, km, (((1,), (1,)), ((), ())),
                                preferred_element_type=jnp.float32) * scale
        s = s - jnp.max(s, axis=-1, keepdims=True)
        p = jnp.exp(s)
        p = p * pl.reciprocal(jnp.sum(p, axis=-1, keepdims=True), approx=True)
        o_ref[m * seq:(m + 1) * seq, :] = jnp.dot(
            p, vm, preferred_element_type=jnp.float32)


def tail_kernel(x_ref, attn_ref, wo_ref, bo_ref, w1_ref, b1_ref,
                w2_ref, b2_ref, o_ref, *, batch, seq, eps):
    """Fused out-projection + (add + LayerNorm) + FFN + (add + LayerNorm)."""
    x = x_ref[...]                                            # (B*S, D)
    x_multi = (jnp.dot(attn_ref[...], wo_ref[...],
                       preferred_element_type=jnp.float32) + bo_ref[...])

    def add_ln(a, b):
        # LayerNorm over (S, D) jointly per batch element; fresh nn.LayerNorm
        # each forward -> affine weight = 1, bias = 0.
        y = a + b
        parts = []
        for bi in range(batch):
            yb = y[bi * seq:(bi + 1) * seq, :]
            mean = jnp.mean(yb)
            var = jnp.mean((yb - mean) ** 2)
            parts.append((yb - mean) * jax.lax.rsqrt(var + eps))
        return parts[0] if batch == 1 else jnp.concatenate(parts, axis=0)

    # TODO(synk): nn.Dropout(p_drop) is stochastic; implemented as identity (eval mode).
    x1 = add_ln(x, x_multi)

    h = jnp.maximum(
        jnp.dot(x1, w1_ref[...], preferred_element_type=jnp.float32)
        + b1_ref[...], 0.0)
    ff = (jnp.dot(h, w2_ref[...], preferred_element_type=jnp.float32)
          + b2_ref[...])

    o_ref[...] = add_ln(x1, ff)        # single (B*S, D) store


# ----------------------------- Pallas wrappers ------------------------------

def fused_qkv_attention(x2d, wqkv, bqkv, batch, seq):
    """QKV projection + attention; mirrors the PyTorch raw head reshape exactly."""
    assert dim_q == dim_k == dim_v == input_dim
    assert seq % heads_num == 0, "fused kernel assumes heads_num | seq"
    D = x2d.shape[1]
    dh = dim_q // heads_num
    rpb = seq // heads_num             # x rows consumed per attention block
    nblk = heads_num * batch           # number of (head, batch) blocks
    # Row-replicated x: row m*seq + s holds x2d[m*rpb + s // heads_num, :].
    xrep = jnp.repeat(x2d.reshape(nblk, rpb, D), heads_num, axis=1)
    xrep = xrep.reshape(nblk * seq, D)

    kern = functools.partial(qkv_attn_kernel, scale=1.0 / math.sqrt(dim_k),
                             heads=heads_num, dh=dh, seq=seq, nblk=nblk)
    o = pl.pallas_call(
        kern,
        out_shape=jax.ShapeDtypeStruct((nblk * seq, dh), jnp.float32),
    )(xrep, wqkv, bqkv.reshape(1, -1))
    # Mirror PyTorch's raw reshape (H, B, S, dh) -> (B, S, dv): same flat order.
    return o.reshape(batch * seq, dim_v)


def fused_tail(x2d, attn2d, params, batch, seq):
    return pl.pallas_call(
        functools.partial(tail_kernel, batch=batch, seq=seq, eps=1e-5),
        out_shape=jax.ShapeDtypeStruct(x2d.shape, jnp.float32),
    )(x2d, attn2d,
      params["wo"], params["bo"].reshape(1, -1),
      params["w1"], params["b1"].reshape(1, -1),
      params["w2"], params["b2"].reshape(1, -1))


# ----------------------------- plain-JAX glue -------------------------------

def positional_encoding(seq_len, d):
    # Reproduces the PyTorch PositionalEncoding exactly: value depends only on j.
    j_i = jnp.arange(d)
    j = j_i.astype(jnp.float32)
    angle = j / jnp.power(10000.0, 2.0 * j / d)
    row = jnp.where(j_i % 2 == 0, jnp.sin(angle), jnp.cos(angle))
    return jnp.broadcast_to(row, (seq_len, d)).astype(jnp.float32)


def init_params(key, vocab_size):
    ks = jax.random.split(key, 12)

    def lin(kw, kb, fan_in, fan_out):
        bound = 1.0 / math.sqrt(fan_in)
        w = jax.random.uniform(kw, (fan_in, fan_out), jnp.float32, -bound, bound)
        b = jax.random.uniform(kb, (fan_out,), jnp.float32, -bound, bound)
        return w, b

    emb = jax.random.normal(ks[0], (vocab_size, input_dim), jnp.float32)
    emb = emb.at[pad].set(0.0)  # padding_idx row is zero

    wq, bq = lin(ks[1], ks[2], input_dim, dim_q)
    wk, bk = lin(ks[3], ks[4], input_dim, dim_k)
    wv, bv = lin(ks[5], ks[6], input_dim, dim_v)
    wo, bo = lin(ks[7], ks[8], dim_v, input_dim)
    w1, b1 = lin(ks[9], ks[10], input_dim, hidden_dim)
    w2, b2 = lin(ks[11], ks[0], hidden_dim, input_dim)
    return dict(emb=emb, wq=wq, bq=bq, wk=wk, bk=bk, wv=wv, bv=bv,
                wo=wo, bo=bo, w1=w1, b1=b1, w2=w2, b2=b2)


def encoder_forward(tokens, params):
    B, S = tokens.shape
    D = input_dim

    # Embedding lookup (gather) + positional encoding -- glue in plain JAX.
    x1 = params["emb"][tokens]                       # (B, S, D)
    x2 = positional_encoding(S, D)                   # (S, D), broadcast over batch
    x = (x1 + x2).astype(jnp.float32)                # (B, S, D)
    x2d = x.reshape(B * S, D)

    # Kernel 1: concatenated QKV projection + all attention blocks.
    wqkv = jnp.concatenate([params["wq"], params["wk"], params["wv"]], axis=1)
    bqkv = jnp.concatenate([params["bq"], params["bk"], params["bv"]])
    attn2d = fused_qkv_attention(x2d, wqkv, bqkv, B, S)      # (B*S, dim_v)

    # Kernel 2: out-projection + add&LN + FFN + add&LN.
    out = fused_tail(x2d, attn2d, params, B, S)              # (B*S, D)
    return out.reshape(B, S, D)


if __name__ == "__main__":
    vocab_size = 11
    B, S = 2, 8

    key = jax.random.PRNGKey(0)
    k_tok, k_par = jax.random.split(key)
    tokens = jax.random.randint(k_tok, (B, S), 0, vocab_size, dtype=jnp.int32)
    params = init_params(k_par, vocab_size)

    out = jax.jit(encoder_forward)(tokens, params)
    out = jax.block_until_ready(out)
    assert out.shape == (B, S, input_dim), out.shape
    assert out.dtype == jnp.float32
    print("KERNEL_OK")
</pallas_src>

<mosaic_0001>
module attributes {stable_mosaic.version = 11 : i64} {
  func.func @tail_kernel(%arg0: memref<16x32xf32, #tpu.memory_space<vmem>>, %arg1: memref<16x32xf32, #tpu.memory_space<vmem>>, %arg2: memref<32x32xf32, #tpu.memory_space<vmem>>, %arg3: memref<1x32xf32, #tpu.memory_space<vmem>>, %arg4: memref<32x64xf32, #tpu.memory_space<vmem>>, %arg5: memref<1x64xf32, #tpu.memory_space<vmem>>, %arg6: memref<64x32xf32, #tpu.memory_space<vmem>>, %arg7: memref<1x32xf32, #tpu.memory_space<vmem>>, %arg8: memref<16x32xf32, #tpu.memory_space<vmem>>) attributes {dimension_semantics = [], scalar_prefetch = 0 : i64, scratch_operands = 0 : i64, tpu.core_type = #tpu.core_type<tc>} {
    %c0 = arith.constant 0 : index
    %c0_0 = arith.constant 0 : index
    %0 = vector.load %arg0[%c0, %c0_0] : memref<16x32xf32, #tpu.memory_space<vmem>>, vector<16x32xf32>
    %c0_1 = arith.constant 0 : index
    %c0_2 = arith.constant 0 : index
    %1 = vector.load %arg1[%c0_1, %c0_2] : memref<16x32xf32, #tpu.memory_space<vmem>>, vector<16x32xf32>
    %c0_3 = arith.constant 0 : index
    %c0_4 = arith.constant 0 : index
    %2 = vector.load %arg2[%c0_3, %c0_4] : memref<32x32xf32, #tpu.memory_space<vmem>>, vector<32x32xf32>
    %cst = arith.constant dense<0.000000e+00> : vector<16x32xf32>
    %3 = tpu.matmul %1, %2, %cst {dimension_numbers = #tpu.dot_dimension_numbers<[1], [0], [0], [1], [0, 0, 1, 1], [], []>} : vector<16x32xf32>, vector<32x32xf32>, vector<16x32xf32> -> vector<16x32xf32>
    %c0_5 = arith.constant 0 : index
    %c0_6 = arith.constant 0 : index
    %4 = vector.load %arg3[%c0_5, %c0_6] : memref<1x32xf32, #tpu.memory_space<vmem>>, vector<1x32xf32>
    %5 = vector.broadcast %4 : vector<1x32xf32> to vector<16x32xf32>
    %6 = arith.addf %3, %5 : vector<16x32xf32>
    %7 = arith.addf %0, %6 : vector<16x32xf32>
    %8 = vector.extract_strided_slice %7 {offsets = [0, 0], sizes = [8, 32], strides = [1, 1]} : vector<16x32xf32> to vector<8x32xf32>
    %9 = vector.shape_cast %8 : vector<8x32xf32> to vector<1x8x32xf32>
    %cst_7 = arith.constant dense<0.000000e+00> : vector<1xf32>
    %10 = vector.multi_reduction <add>, %9, %cst_7 [1, 2] : vector<1x8x32xf32> to vector<1xf32>
    %11 = vector.shape_cast %10 : vector<1xf32> to vector<1x1x1xf32>
    %12 = vector.extract %11[0, 0, 0] : f32 from vector<1x1x1xf32>
    %cst_8 = arith.constant 2.560000e+02 : f32
    %13 = arith.divf %12, %cst_8 : f32
    %14 = vector.broadcast %13 : f32 to vector<8x32xf32>
    %15 = arith.subf %8, %14 : vector<8x32xf32>
    %16 = arith.mulf %15, %15 : vector<8x32xf32>
    %17 = vector.shape_cast %16 : vector<8x32xf32> to vector<1x8x32xf32>
    %cst_9 = arith.constant dense<0.000000e+00> : vector<1xf32>
    %18 = vector.multi_reduction <add>, %17, %cst_9 [1, 2] : vector<1x8x32xf32> to vector<1xf32>
    %19 = vector.shape_cast %18 : vector<1xf32> to vector<1x1x1xf32>
    %20 = vector.extract %19[0, 0, 0] : f32 from vector<1x1x1xf32>
    %cst_10 = arith.constant 2.560000e+02 : f32
    %21 = arith.divf %20, %cst_10 : f32
    %22 = vector.broadcast %13 : f32 to vector<8x32xf32>
    %23 = arith.subf %8, %22 : vector<8x32xf32>
    %cst_11 = arith.constant 9.99999974E-6 : f32
    %24 = arith.addf %21, %cst_11 : f32
    %25 = math.rsqrt %24 : f32
    %26 = vector.broadcast %25 : f32 to vector<8x32xf32>
    %27 = arith.mulf %23, %26 : vector<8x32xf32>
    %28 = vector.extract_strided_slice %7 {offsets = [8, 0], sizes = [8, 32], strides = [1, 1]} : vector<16x32xf32> to vector<8x32xf32>
    %29 = vector.shape_cast %28 : vector<8x32xf32> to vector<1x8x32xf32>
    %cst_12 = arith.constant dense<0.000000e+00> : vector<1xf32>
    %30 = vector.multi_reduction <add>, %29, %cst_12 [1, 2] : vector<1x8x32xf32> to vector<1xf32>
    %31 = vector.shape_cast %30 : vector<1xf32> to vector<1x1x1xf32>
    %32 = vector.extract %31[0, 0, 0] : f32 from vector<1x1x1xf32>
    %cst_13 = arith.constant 2.560000e+02 : f32
    %33 = arith.divf %32, %cst_13 : f32
    %34 = vector.broadcast %33 : f32 to vector<8x32xf32>
    %35 = arith.subf %28, %34 : vector<8x32xf32>
    %36 = arith.mulf %35, %35 : vector<8x32xf32>
    %37 = vector.shape_cast %36 : vector<8x32xf32> to vector<1x8x32xf32>
    %cst_14 = arith.constant dense<0.000000e+00> : vector<1xf32>
    %38 = vector.multi_reduction <add>, %37, %cst_14 [1, 2] : vector<1x8x32xf32> to vector<1xf32>
    %39 = vector.shape_cast %38 : vector<1xf32> to vector<1x1x1xf32>
    %40 = vector.extract %39[0, 0, 0] : f32 from vector<1x1x1xf32>
    %cst_15 = arith.constant 2.560000e+02 : f32
    %41 = arith.divf %40, %cst_15 : f32
    %42 = vector.broadcast %33 : f32 to vector<8x32xf32>
    %43 = arith.subf %28, %42 : vector<8x32xf32>
    %cst_16 = arith.constant 9.99999974E-6 : f32
    %44 = arith.addf %41, %cst_16 : f32
    %45 = math.rsqrt %44 : f32
    %46 = vector.broadcast %45 : f32 to vector<8x32xf32>
    %47 = arith.mulf %43, %46 : vector<8x32xf32>
    %48 = tpu.concatenate %27, %47 in 0 : vector<8x32xf32>, vector<8x32xf32> -> vector<16x32xf32>
    %c0_17 = arith.constant 0 : index
    %c0_18 = arith.constant 0 : index
    %49 = vector.load %arg4[%c0_17, %c0_18] : memref<32x64xf32, #tpu.memory_space<vmem>>, vector<32x64xf32>
    %cst_19 = arith.constant dense<0.000000e+00> : vector<16x64xf32>
    %50 = tpu.matmul %48, %49, %cst_19 {dimension_numbers = #tpu.dot_dimension_numbers<[1], [0], [0], [1], [0, 0, 1, 1], [], []>} : vector<16x32xf32>, vector<32x64xf32>, vector<16x64xf32> -> vector<16x64xf32>
    %c0_20 = arith.constant 0 : index
    %c0_21 = arith.constant 0 : index
    %51 = vector.load %arg5[%c0_20, %c0_21] : memref<1x64xf32, #tpu.memory_space<vmem>>, vector<1x64xf32>
    %52 = vector.broadcast %51 : vector<1x64xf32> to vector<16x64xf32>
    %53 = arith.addf %50, %52 : vector<16x64xf32>
    %cst_22 = arith.constant 0.000000e+00 : f32
    %54 = vector.broadcast %cst_22 : f32 to vector<16x64xf32>
    %55 = arith.maximumf %53, %54 : vector<16x64xf32>
    %c0_23 = arith.constant 0 : index
    %c0_24 = arith.constant 0 : index
    %56 = vector.load %arg6[%c0_23, %c0_24] : memref<64x32xf32, #tpu.memory_space<vmem>>, vector<64x32xf32>
    %cst_25 = arith.constant dense<0.000000e+00> : vector<16x32xf32>
    %57 = tpu.matmul %55, %56, %cst_25 {dimension_numbers = #tpu.dot_dimension_numbers<[1], [0], [0], [1], [0, 0, 1, 1], [], []>} : vector<16x64xf32>, vector<64x32xf32>, vector<16x32xf32> -> vector<16x32xf32>
    %c0_26 = arith.constant 0 : index
    %c0_27 = arith.constant 0 : index
    %58 = vector.load %arg7[%c0_26, %c0_27] : memref<1x32xf32, #tpu.memory_space<vmem>>, vector<1x32xf32>
    %59 = vector.broadcast %58 : vector<1x32xf32> to vector<16x32xf32>
    %60 = arith.addf %57, %59 : vector<16x32xf32>
    %61 = arith.addf %48, %60 : vector<16x32xf32>
    %62 = vector.extract_strided_slice %61 {offsets = [0, 0], sizes = [8, 32], strides = [1, 1]} : vector<16x32xf32> to vector<8x32xf32>
    %63 = vector.shape_cast %62 : vector<8x32xf32> to vector<1x8x32xf32>
    %cst_28 = arith.constant dense<0.000000e+00> : vector<1xf32>
    %64 = vector.multi_reduction <add>, %63, %cst_28 [1, 2] : vector<1x8x32xf32> to vector<1xf32>
    %65 = vector.shape_cast %64 : vector<1xf32> to vector<1x1x1xf32>
    %66 = vector.extract %65[0, 0, 0] : f32 from vector<1x1x1xf32>
    %cst_29 = arith.constant 2.560000e+02 : f32
    %67 = arith.divf %66, %cst_29 : f32
    %68 = vector.broadcast %67 : f32 to vector<8x32xf32>
    %69 = arith.subf %62, %68 : vector<8x32xf32>
    %70 = arith.mulf %69, %69 : vector<8x32xf32>
    %71 = vector.shape_cast %70 : vector<8x32xf32> to vector<1x8x32xf32>
    %cst_30 = arith.constant dense<0.000000e+00> : vector<1xf32>
    %72 = vector.multi_reduction <add>, %71, %cst_30 [1, 2] : vector<1x8x32xf32> to vector<1xf32>
    %73 = vector.shape_cast %72 : vector<1xf32> to vector<1x1x1xf32>
    %74 = vector.extract %73[0, 0, 0] : f32 from vector<1x1x1xf32>
    %cst_31 = arith.constant 2.560000e+02 : f32
    %75 = arith.divf %74, %cst_31 : f32
    %76 = vector.broadcast %67 : f32 to vector<8x32xf32>
    %77 = arith.subf %62, %76 : vector<8x32xf32>
    %cst_32 = arith.constant 9.99999974E-6 : f32
    %78 = arith.addf %75, %cst_32 : f32
    %79 = math.rsqrt %78 : f32
    %80 = vector.broadcast %79 : f32 to vector<8x32xf32>
    %81 = arith.mulf %77, %80 : vector<8x32xf32>
    %82 = vector.extract_strided_slice %61 {offsets = [8, 0], sizes = [8, 32], strides = [1, 1]} : vector<16x32xf32> to vector<8x32xf32>
    %83 = vector.shape_cast %82 : vector<8x32xf32> to vector<1x8x32xf32>
    %cst_33 = arith.constant dense<0.000000e+00> : vector<1xf32>
    %84 = vector.multi_reduction <add>, %83, %cst_33 [1, 2] : vector<1x8x32xf32> to vector<1xf32>
    %85 = vector.shape_cast %84 : vector<1xf32> to vector<1x1x1xf32>
    %86 = vector.extract %85[0, 0, 0] : f32 from vector<1x1x1xf32>
    %cst_34 = arith.constant 2.560000e+02 : f32
    %87 = arith.divf %86, %cst_34 : f32
    %88 = vector.broadcast %87 : f32 to vector<8x32xf32>
    %89 = arith.subf %82, %88 : vector<8x32xf32>
    %90 = arith.mulf %89, %89 : vector<8x32xf32>
    %91 = vector.shape_cast %90 : vector<8x32xf32> to vector<1x8x32xf32>
    %cst_35 = arith.constant dense<0.000000e+00> : vector<1xf32>
    %92 = vector.multi_reduction <add>, %91, %cst_35 [1, 2] : vector<1x8x32xf32> to vector<1xf32>
    %93 = vector.shape_cast %92 : vector<1xf32> to vector<1x1x1xf32>
    %94 = vector.extract %93[0, 0, 0] : f32 from vector<1x1x1xf32>
    %cst_36 = arith.constant 2.560000e+02 : f32
    %95 = arith.divf %94, %cst_36 : f32
    %96 = vector.broadcast %87 : f32 to vector<8x32xf32>
    %97 = arith.subf %82, %96 : vector<8x32xf32>
    %cst_37 = arith.constant 9.99999974E-6 : f32
    %98 = arith.addf %95, %cst_37 : f32
    %99 = math.rsqrt %98 : f32
    %100 = vector.broadcast %99 : f32 to vector<8x32xf32>
    %101 = arith.mulf %97, %100 : vector<8x32xf32>
    %102 = tpu.concatenate %81, %101 in 0 : vector<8x32xf32>, vector<8x32xf32> -> vector<16x32xf32>
    %c0_38 = arith.constant 0 : index
    %c0_39 = arith.constant 0 : index
    %103 = vector.load %arg8[%c0_38, %c0_39] : memref<16x32xf32, #tpu.memory_space<vmem>>, vector<16x32xf32>
    tpu.vector_store %arg8[%c0_38, %c0_39], %102 {strides = array<i32>} : memref<16x32xf32, #tpu.memory_space<vmem>>, vector<16x32xf32>,
    return
  }
}

module attributes {stable_mosaic.version = 11 : i64} {
  func.func @qkv_attn_kernel(%arg0: memref<64x32xf32, #tpu.memory_space<vmem>>, %arg1: memref<32x96xf32, #tpu.memory_space<vmem>>, %arg2: memref<1x96xf32, #tpu.memory_space<vmem>>, %arg3: memref<64x8xf32, #tpu.memory_space<vmem>>) attributes {dimension_semantics = [], scalar_prefetch = 0 : i64, scratch_operands = 0 : i64, tpu.core_type = #tpu.core_type<tc>} {
    %c0 = arith.constant 0 : index
    %c0_0 = arith.constant 0 : index
    %0 = vector.load %arg0[%c0, %c0_0] : memref<64x32xf32, #tpu.memory_space<vmem>>, vector<64x32xf32>
    %c0_1 = arith.constant 0 : index
    %c0_2 = arith.constant 0 : index
    %1 = vector.load %arg1[%c0_1, %c0_2] : memref<32x96xf32, #tpu.memory_space<vmem>>, vector<32x96xf32>
    %cst = arith.constant dense<0.000000e+00> : vector<64x96xf32>
    %2 = tpu.matmul %0, %1, %cst {dimension_numbers = #tpu.dot_dimension_numbers<[1], [0], [0], [1], [0, 0, 1, 1], [], []>} : vector<64x32xf32>, vector<32x96xf32>, vector<64x96xf32> -> vector<64x96xf32>
    %c0_3 = arith.constant 0 : index
    %c0_4 = arith.constant 0 : index
    %3 = vector.load %arg2[%c0_3, %c0_4] : memref<1x96xf32, #tpu.memory_space<vmem>>, vector<1x96xf32>
    %4 = vector.broadcast %3 : vector<1x96xf32> to vector<64x96xf32>
    %5 = arith.addf %2, %4 : vector<64x96xf32>
    %6 = tpu.iota {dimensions = array<i32: 0>} : vector<64x1xi32>
    %c4_i32 = arith.constant 4 : i32
    %c0_i32 = arith.constant 0 : i32
    %7 = arith.cmpi eq, %c4_i32, %c0_i32 : i32
    %c1_i32 = arith.constant 1 : i32
    %8 = arith.select %7, %c1_i32, %c4_i32 : i32
    %9 = vector.broadcast %8 : i32 to vector<64x1xi32>
    %10 = arith.remsi %6, %9 : vector<64x1xi32>
    %c0_i32_5 = arith.constant 0 : i32
    %11 = vector.broadcast %c0_i32_5 : i32 to vector<64x1xi32>
    %12 = arith.cmpi ne, %10, %11 : vector<64x1xi32>
    %c0_i32_6 = arith.constant 0 : i32
    %13 = vector.broadcast %c0_i32_6 : i32 to vector<64x1xi32>
    %14 = arith.cmpi slt, %10, %13 : vector<64x1xi32>
    %c0_i32_7 = arith.constant 0 : i32
    %15 = arith.cmpi slt, %8, %c0_i32_7 : i32
    %16 = vector.broadcast %15 : i1 to vector<64x1xi1>
    %17 = vector.broadcast %16 : vector<64x1xi1> to vector<64x1xi1>
    %18 = arith.xori %14, %17 : vector<64x1xi1>
    %19 = arith.andi %18, %12 : vector<64x1xi1>
    %20 = vector.broadcast %8 : i32 to vector<64x1xi32>
    %21 = arith.addi %10, %20 : vector<64x1xi32>
    %22 = arith.select %19, %21, %10 : vector<64x1xi1>, vector<64x1xi32>
    %23 = vector.extract_strided_slice %5 {offsets = [0, 0], sizes = [64, 32], strides = [1, 1]} : vector<64x96xf32> to vector<64x32xf32>
    %cst_8 = arith.constant 0.000000e+00 : f32
    %24 = vector.broadcast %cst_8 : f32 to vector<64x8xf32>
    %c0_i32_9 = arith.constant 0 : i32
    %25 = vector.broadcast %c0_i32_9 : i32 to vector<64x1xi32>
    %26 = arith.cmpi eq, %22, %25 : vector<64x1xi32>
    %27 = vector.extract_strided_slice %23 {offsets = [0, 0], sizes = [64, 8], strides = [1, 1]} : vector<64x32xf32> to vector<64x8xf32>
    %28 = vector.shape_cast %26 : vector<64x1xi1> to vector<64x1xi1>
    %29 = vector.broadcast %28 : vector<64x1xi1> to vector<64x8xi1>
    %30 = arith.select %29, %27, %24 : vector<64x8xi1>, vector<64x8xf32>
    %c1_i32_10 = arith.constant 1 : i32
    %31 = vector.broadcast %c1_i32_10 : i32 to vector<64x1xi32>
    %32 = arith.cmpi eq, %22, %31 : vector<64x1xi32>
    %33 = vector.extract_strided_slice %23 {offsets = [0, 8], sizes = [64, 8], strides = [1, 1]} : vector<64x32xf32> to vector<64x8xf32>
    %34 = vector.shape_cast %32 : vector<64x1xi1> to vector<64x1xi1>
    %35 = vector.broadcast %34 : vector<64x1xi1> to vector<64x8xi1>
    %36 = arith.select %35, %33, %30 : vector<64x8xi1>, vector<64x8xf32>
    %c2_i32 = arith.constant 2 : i32
    %37 = vector.broadcast %c2_i32 : i32 to vector<64x1xi32>
    %38 = arith.cmpi eq, %22, %37 : vector<64x1xi32>
    %39 = vector.extract_strided_slice %23 {offsets = [0, 16], sizes = [64, 8], strides = [1, 1]} : vector<64x32xf32> to vector<64x8xf32>
    %40 = vector.shape_cast %38 : vector<64x1xi1> to vector<64x1xi1>
    %41 = vector.broadcast %40 : vector<64x1xi1> to vector<64x8xi1>
    %42 = arith.select %41, %39, %36 : vector<64x8xi1>, vector<64x8xf32>
    %c3_i32 = arith.constant 3 : i32
    %43 = vector.broadcast %c3_i32 : i32 to vector<64x1xi32>
    %44 = arith.cmpi eq, %22, %43 : vector<64x1xi32>
    %45 = vector.extract_strided_slice %23 {offsets = [0, 24], sizes = [64, 8], strides = [1, 1]} : vector<64x32xf32> to vector<64x8xf32>
    %46 = vector.shape_cast %44 : vector<64x1xi1> to vector<64x1xi1>
    %47 = vector.broadcast %46 : vector<64x1xi1> to vector<64x8xi1>
    %48 = arith.select %47, %45, %42 : vector<64x8xi1>, vector<64x8xf32>
    %49 = vector.extract_strided_slice %5 {offsets = [0, 32], sizes = [64, 32], strides = [1, 1]} : vector<64x96xf32> to vector<64x32xf32>
    %cst_11 = arith.constant 0.000000e+00 : f32
    %50 = vector.broadcast %cst_11 : f32 to vector<64x8xf32>
    %c0_i32_12 = arith.constant 0 : i32
    %51 = vector.broadcast %c0_i32_12 : i32 to vector<64x1xi32>
    %52 = arith.cmpi eq, %22, %51 : vector<64x1xi32>
    %53 = vector.extract_strided_slice %49 {offsets = [0, 0], sizes = [64, 8], strides = [1, 1]} : vector<64x32xf32> to vector<64x8xf32>
    %54 = vector.shape_cast %52 : vector<64x1xi1> to vector<64x1xi1>
    %55 = vector.broadcast %54 : vector<64x1xi1> to vector<64x8xi1>
    %56 = arith.select %55, %53, %50 : vector<64x8xi1>, vector<64x8xf32>
    %c1_i32_13 = arith.constant 1 : i32
    %57 = vector.broadcast %c1_i32_13 : i32 to vector<64x1xi32>
    %58 = arith.cmpi eq, %22, %57 : vector<64x1xi32>
    %59 = vector.extract_strided_slice %49 {offsets = [0, 8], sizes = [64, 8], strides = [1, 1]} : vector<64x32xf32> to vector<64x8xf32>
    %60 = vector.shape_cast %58 : vector<64x1xi1> to vector<64x1xi1>
    %61 = vector.broadcast %60 : vector<64x1xi1> to vector<64x8xi1>
    %62 = arith.select %61, %59, %56 : vector<64x8xi1>, vector<64x8xf32>
    %c2_i32_14 = arith.constant 2 : i32
    %63 = vector.broadcast %c2_i32_14 : i32 to vector<64x1xi32>
    %64 = arith.cmpi eq, %22, %63 : vector<64x1xi32>
    %65 = vector.extract_strided_slice %49 {offsets = [0, 16], sizes = [64, 8], strides = [1, 1]} : vector<64x32xf32> to vector<64x8xf32>
    %66 = vector.shape_cast %64 : vector<64x1xi1> to vector<64x1xi1>
    %67 = vector.broadcast %66 : vector<64x1xi1> to vector<64x8xi1>
    %68 = arith.select %67, %65, %62 : vector<64x8xi1>, vector<64x8xf32>
    %c3_i32_15 = arith.constant 3 : i32
    %69 = vector.broadcast %c3_i32_15 : i32 to vector<64x1xi32>
    %70 = arith.cmpi eq, %22, %69 : vector<64x1xi32>
    %71 = vector.extract_strided_slice %49 {offsets = [0, 24], sizes = [64, 8], strides = [1, 1]} : vector<64x32xf32> to vector<64x8xf32>
    %72 = vector.shape_cast %70 : vector<64x1xi1> to vector<64x1xi1>
    %73 = vector.broadcast %72 : vector<64x1xi1> to vector<64x8xi1>
    %74 = arith.select %73, %71, %68 : vector<64x8xi1>, vector<64x8xf32>
    %75 = vector.extract_strided_slice %5 {offsets = [0, 64], sizes = [64, 32], strides = [1, 1]} : vector<64x96xf32> to vector<64x32xf32>
    %cst_16 = arith.constant 0.000000e+00 : f32
    %76 = vector.broadcast %cst_16 : f32 to vector<64x8xf32>
    %c0_i32_17 = arith.constant 0 : i32
    %77 = vector.broadcast %c0_i32_17 : i32 to vector<64x1xi32>
    %78 = arith.cmpi eq, %22, %77 : vector<64x1xi32>
    %79 = vector.extract_strided_slice %75 {offsets = [0, 0], sizes = [64, 8], strides = [1, 1]} : vector<64x32xf32> to vector<64x8xf32>
    %80 = vector.shape_cast %78 : vector<64x1xi1> to vector<64x1xi1>
    %81 = vector.broadcast %80 : vector<64x1xi1> to vector<64x8xi1>
    %82 = arith.select %81, %79, %76 : vector<64x8xi1>, vector<64x8xf32>
    %c1_i32_18 = arith.constant 1 : i32
    %83 = vector.broadcast %c1_i32_18 : i32 to vector<64x1xi32>
    %84 = arith.cmpi eq, %22, %83 : vector<64x1xi32>
    %85 = vector.extract_strided_slice %75 {offsets = [0, 8], sizes = [64, 8], strides = [1, 1]} : vector<64x32xf32> to vector<64x8xf32>
    %86 = vector.shape_cast %84 : vector<64x1xi1> to vector<64x1xi1>
    %87 = vector.broadcast %86 : vector<64x1xi1> to vector<64x8xi1>
    %88 = arith.select %87, %85, %82 : vector<64x8xi1>, vector<64x8xf32>
    %c2_i32_19 = arith.constant 2 : i32
    %89 = vector.broadcast %c2_i32_19 : i32 to vector<64x1xi32>
    %90 = arith.cmpi eq, %22, %89 : vector<64x1xi32>
    %91 = vector.extract_strided_slice %75 {offsets = [0, 16], sizes = [64, 8], strides = [1, 1]} : vector<64x32xf32> to vector<64x8xf32>
    %92 = vector.shape_cast %90 : vector<64x1xi1> to vector<64x1xi1>
    %93 = vector.broadcast %92 : vector<64x1xi1> to vector<64x8xi1>
    %94 = arith.select %93, %91, %88 : vector<64x8xi1>, vector<64x8xf32>
    %c3_i32_20 = arith.constant 3 : i32
    %95 = vector.broadcast %c3_i32_20 : i32 to vector<64x1xi32>
    %96 = arith.cmpi eq, %22, %95 : vector<64x1xi32>
    %97 = vector.extract_strided_slice %75 {offsets = [0, 24], sizes = [64, 8], strides = [1, 1]} : vector<64x32xf32> to vector<64x8xf32>
    %98 = vector.shape_cast %96 : vector<64x1xi1> to vector<64x1xi1>
    %99 = vector.broadcast %98 : vector<64x1xi1> to vector<64x8xi1>
    %100 = arith.select %99, %97, %94 : vector<64x8xi1>, vector<64x8xf32>
    %101 = vector.extract_strided_slice %48 {offsets = [0, 0], sizes = [8, 8], strides = [1, 1]} : vector<64x8xf32> to vector<8x8xf32>
    %102 = vector.extract_strided_slice %74 {offsets = [0, 0], sizes = [8, 8], strides = [1, 1]} : vector<64x8xf32> to vector<8x8xf32>
    %103 = vector.extract_strided_slice %100 {offsets = [0, 0], sizes = [8, 8], strides = [1, 1]} : vector<64x8xf32> to vector<8x8xf32>
    %cst_21 = arith.constant dense<0.000000e+00> : vector<8x8xf32>
    %104 = tpu.matmul %101, %102, %cst_21 {dimension_numbers = #tpu.dot_dimension_numbers<[1], [1], [0], [0], [0, 0, 1, 0], [], []>} : vector<8x8xf32>, vector<8x8xf32>, vector<8x8xf32> -> vector<8x8xf32>
    %cst_22 = arith.constant 0.176776692 : f32
    %105 = vector.broadcast %cst_22 : f32 to vector<8x8xf32>
    %106 = arith.mulf %104, %105 : vector<8x8xf32>
    %cst_23 = arith.constant dense<0xFF800000> : vector<8xf32>
    %107 = vector.multi_reduction <maximumf>, %106, %cst_23 [1] : vector<8x8xf32> to vector<8xf32>
    %108 = vector.shape_cast %107 : vector<8xf32> to vector<8x1xf32>
    %109 = vector.broadcast %108 : vector<8x1xf32> to vector<8x8xf32>
    %110 = arith.subf %106, %109 : vector<8x8xf32>
    %111 = math.exp %110 : vector<8x8xf32>
    %cst_24 = arith.constant dense<0.000000e+00> : vector<8xf32>
    %112 = vector.multi_reduction <add>, %111, %cst_24 [1] : vector<8x8xf32> to vector<8xf32>
    %113 = vector.shape_cast %112 : vector<8xf32> to vector<8x1xf32>
    %114 = tpu.reciprocal %113 {approx = true} : vector<8x1xf32> -> vector<8x1xf32>
    %115 = vector.broadcast %114 : vector<8x1xf32> to vector<8x8xf32>
    %116 = arith.mulf %111, %115 : vector<8x8xf32>
    %cst_25 = arith.constant dense<0.000000e+00> : vector<8x8xf32>
    %117 = tpu.matmul %116, %103, %cst_25 {dimension_numbers = #tpu.dot_dimension_numbers<[1], [0], [0], [1], [0, 0, 1, 1], [], []>} : vector<8x8xf32>, vector<8x8xf32>, vector<8x8xf32> -> vector<8x8xf32>
    %c0_26 = arith.constant 0 : index
    %c0_27 = arith.constant 0 : index
    %118 = vector.load %arg3[%c0_26, %c0_27] : memref<64x8xf32, #tpu.memory_space<vmem>>, vector<8x8xf32>
    tpu.vector_store %arg3[%c0_26, %c0_27], %117 {strides = array<i32>} : memref<64x8xf32, #tpu.memory_space<vmem>>, vector<8x8xf32>,
    %119 = vector.extract_strided_slice %48 {offsets = [8, 0], sizes = [8, 8], strides = [1, 1]} : vector<64x8xf32> to vector<8x8xf32>
    %120 = vector.extract_strided_slice %74 {offsets = [8, 0], sizes = [8, 8], strides = [1, 1]} : vector<64x8xf32> to vector<8x8xf32>
    %121 = vector.extract_strided_slice %100 {offsets = [8, 0], sizes = [8, 8], strides = [1, 1]} : vector<64x8xf32> to vector<8x8xf32>
    %cst_28 = arith.constant dense<0.000000e+00> : vector<8x8xf32>
    %122 = tpu.matmul %119, %120, %cst_28 {dimension_numbers = #tpu.dot_dimension_numbers<[1], [1], [0], [0], [0, 0, 1, 0], [], []>} : vector<8x8xf32>, vector<8x8xf32>, vector<8x8xf32> -> vector<8x8xf32>
    %cst_29 = arith.constant 0.176776692 : f32
    %123 = vector.broadcast %cst_29 : f32 to vector<8x8xf32>
    %124 = arith.mulf %122, %123 : vector<8x8xf32>
    %cst_30 = arith.constant dense<0xFF800000> : vector<8xf32>
    %125 = vector.multi_reduction <maximumf>, %124, %cst_30 [1] : vector<8x8xf32> to vector<8xf32>
    %126 = vector.shape_cast %125 : vector<8xf32> to vector<8x1xf32>
    %127 = vector.broadcast %126 : vector<8x1xf32> to vector<8x8xf32>
    %128 = arith.subf %124, %127 : vector<8x8xf32>
    %129 = math.exp %128 : vector<8x8xf32>
    %cst_31 = arith.constant dense<0.000000e+00> : vector<8xf32>
    %130 = vector.multi_reduction <add>, %129, %cst_31 [1] : vector<8x8xf32> to vector<8xf32>
    %131 = vector.shape_cast %130 : vector<8xf32> to vector<8x1xf32>
    %132 = tpu.reciprocal %131 {approx = true} : vector<8x1xf32> -> vector<8x1xf32>
    %133 = vector.broadcast %132 : vector<8x1xf32> to vector<8x8xf32>
    %134 = arith.mulf %129, %133 : vector<8x8xf32>
    %cst_32 = arith.constant dense<0.000000e+00> : vector<8x8xf32>
    %135 = tpu.matmul %134, %121, %cst_32 {dimension_numbers = #tpu.dot_dimension_numbers<[1], [0], [0], [1], [0, 0, 1, 1], [], []>} : vector<8x8xf32>, vector<8x8xf32>, vector<8x8xf32> -> vector<8x8xf32>
    %c8 = arith.constant 8 : index
    %c0_33 = arith.constant 0 : index
    %136 = vector.load %arg3[%c8, %c0_33] : memref<64x8xf32, #tpu.memory_space<vmem>>, vector<8x8xf32>
    tpu.vector_store %arg3[%c8, %c0_33], %135 {strides = array<i32>} : memref<64x8xf32, #tpu.memory_space<vmem>>, vector<8x8xf32>,
    %137 = vector.extract_strided_slice %48 {offsets = [16, 0], sizes = [8, 8], strides = [1, 1]} : vector<64x8xf32> to vector<8x8xf32>
    %138 = vector.extract_strided_slice %74 {offsets = [16, 0], sizes = [8, 8], strides = [1, 1]} : vector<64x8xf32> to vector<8x8xf32>
    %139 = vector.extract_strided_slice %100 {offsets = [16, 0], sizes = [8, 8], strides = [1, 1]} : vector<64x8xf32> to vector<8x8xf32>
    %cst_34 = arith.constant dense<0.000000e+00> : vector<8x8xf32>
    %140 = tpu.matmul %137, %138, %cst_34 {dimension_numbers = #tpu.dot_dimension_numbers<[1], [1], [0], [0], [0, 0, 1, 0], [], []>} : vector<8x8xf32>, vector<8x8xf32>, vector<8x8xf32> -> vector<8x8xf32>
    %cst_35 = arith.constant 0.176776692 : f32
    %141 = vector.broadcast %cst_35 : f32 to vector<8x8xf32>
    %142 = arith.mulf %140, %141 : vector<8x8xf32>
    %cst_36 = arith.constant dense<0xFF800000> : vector<8xf32>
    %143 = vector.multi_reduction <maximumf>, %142, %cst_36 [1] : vector<8x8xf32> to vector<8xf32>
    %144 = vector.shape_cast %143 : vector<8xf32> to vector<8x1xf32>
    %145 = vector.broadcast %144 : vector<8x1xf32> to vector<8x8xf32>
    %146 = arith.subf %142, %145 : vector<8x8xf32>
    %147 = math.exp %146 : vector<8x8xf32>
    %cst_37 = arith.constant dense<0.000000e+00> : vector<8xf32>
    %148 = vector.multi_reduction <add>, %147, %cst_37 [1] : vector<8x8xf32> to vector<8xf32>
    %149 = vector.shape_cast %148 : vector<8xf32> to vector<8x1xf32>
    %150 = tpu.reciprocal %149 {approx = true} : vector<8x1xf32> -> vector<8x1xf32>
    %151 = vector.broadcast %150 : vector<8x1xf32> to vector<8x8xf32>
    %152 = arith.mulf %147, %151 : vector<8x8xf32>
    %cst_38 = arith.constant dense<0.000000e+00> : vector<8x8xf32>
    %153 = tpu.matmul %152, %139, %cst_38 {dimension_numbers = #tpu.dot_dimension_numbers<[1], [0], [0], [1], [0, 0, 1, 1], [], []>} : vector<8x8xf32>, vector<8x8xf32>, vector<8x8xf32> -> vector<8x8xf32>
    %c16 = arith.constant 16 : index
    %c0_39 = arith.constant 0 : index
    %154 = vector.load %arg3[%c16, %c0_39] : memref<64x8xf32, #tpu.memory_space<vmem>>, vector<8x8xf32>
    tpu.vector_store %arg3[%c16, %c0_39], %153 {strides = array<i32>} : memref<64x8xf32, #tpu.memory_space<vmem>>, vector<8x8xf32>,
    %155 = vector.extract_strided_slice %48 {offsets = [24, 0], sizes = [8, 8], strides = [1, 1]} : vector<64x8xf32> to vector<8x8xf32>
    %156 = vector.extract_strided_slice %74 {offsets = [24, 0], sizes = [8, 8], strides = [1, 1]} : vector<64x8xf32> to vector<8x8xf32>
    %157 = vector.extract_strided_slice %100 {offsets = [24, 0], sizes = [8, 8], strides = [1, 1]} : vector<64x8xf32> to vector<8x8xf32>
    %cst_40 = arith.constant dense<0.000000e+00> : vector<8x8xf32>
    %158 = tpu.matmul %155, %156, %cst_40 {dimension_numbers = #tpu.dot_dimension_numbers<[1], [1], [0], [0], [0, 0, 1, 0], [], []>} : vector<8x8xf32>, vector<8x8xf32>, vector<8x8xf32> -> vector<8x8xf32>
    %cst_41 = arith.constant 0.176776692 : f32
    %159 = vector.broadcast %cst_41 : f32 to vector<8x8xf32>
    %160 = arith.mulf %158, %159 : vector<8x8xf32>
    %cst_42 = arith.constant dense<0xFF800000> : vector<8xf32>
    %161 = vector.multi_reduction <maximumf>, %160, %cst_42 [1] : vector<8x8xf32> to vector<8xf32>
    %162 = vector.shape_cast %161 : vector<8xf32> to vector<8x1xf32>
    %163 = vector.broadcast %162 : vector<8x1xf32> to vector<8x8xf32>
    %164 = arith.subf %160, %163 : vector<8x8xf32>
    %165 = math.exp %164 : vector<8x8xf32>
    %cst_43 = arith.constant dense<0.000000e+00> : vector<8xf32>
    %166 = vector.multi_reduction <add>, %165, %cst_43 [1] : vector<8x8xf32> to vector<8xf32>
    %167 = vector.shape_cast %166 : vector<8xf32> to vector<8x1xf32>
    %168 = tpu.reciprocal %167 {approx = true} : vector<8x1xf32> -> vector<8x1xf32>
    %169 = vector.broadcast %168 : vector<8x1xf32> to vector<8x8xf32>
    %170 = arith.mulf %165, %169 : vector<8x8xf32>
    %cst_44 = arith.constant dense<0.000000e+00> : vector<8x8xf32>
    %171 = tpu.matmul %170, %157, %cst_44 {dimension_numbers = #tpu.dot_dimension_numbers<[1], [0], [0], [1], [0, 0, 1, 1], [], []>} : vector<8x8xf32>, vector<8x8xf32>, vector<8x8xf32> -> vector<8x8xf32>
    %c24 = arith.constant 24 : index
    %c0_45 = arith.constant 0 : index
    %172 = vector.load %arg3[%c24, %c0_45] : memref<64x8xf32, #tpu.memory_space<vmem>>, vector<8x8xf32>
    tpu.vector_store %arg3[%c24, %c0_45], %171 {strides = array<i32>} : memref<64x8xf32, #tpu.memory_space<vmem>>, vector<8x8xf32>,
    %173 = vector.extract_strided_slice %48 {offsets = [32, 0], sizes = [8, 8], strides = [1, 1]} : vector<64x8xf32> to vector<8x8xf32>
    %174 = vector.extract_strided_slice %74 {offsets = [32, 0], sizes = [8, 8], strides = [1, 1]} : vector<64x8xf32> to vector<8x8xf32>
    %175 = vector.extract_strided_slice %100 {offsets = [32, 0], sizes = [8, 8], strides = [1, 1]} : vector<64x8xf32> to vector<8x8xf32>
    %cst_46 = arith.constant dense<0.000000e+00> : vector<8x8xf32>
    %176 = tpu.matmul %173, %174, %cst_46 {dimension_numbers = #tpu.dot_dimension_numbers<[1], [1], [0], [0], [0, 0, 1, 0], [], []>} : vector<8x8xf32>, vector<8x8xf32>, vector<8x8xf32> -> vector<8x8xf32>
    %cst_47 = arith.constant 0.176776692 : f32
    %177 = vector.broadcast %cst_47 : f32 to vector<8x8xf32>
    %178 = arith.mulf %176, %177 : vector<8x8xf32>
    %cst_48 = arith.constant dense<0xFF800000> : vector<8xf32>
    %179 = vector.multi_reduction <maximumf>, %178, %cst_48 [1] : vector<8x8xf32> to vector<8xf32>
    %180 = vector.shape_cast %179 : vector<8xf32> to vector<8x1xf32>
    %181 = vector.broadcast %180 : vector<8x1xf32> to vector<8x8xf32>
    %182 = arith.subf %178, %181 : vector<8x8xf32>
    %183 = math.exp %182 : vector<8x8xf32>
    %cst_49 = arith.constant dense<0.000000e+00> : vector<8xf32>
    %184 = vector.multi_reduction <add>, %183, %cst_49 [1] : vector<8x8xf32> to vector<8xf32>
    %185 = vector.shape_cast %184 : vector<8xf32> to vector<8x1xf32>
    %186 = tpu.reciprocal %185 {approx = true} : vector<8x1xf32> -> vector<8x1xf32>
    %187 = vector.broadcast %186 : vector<8x1xf32> to vector<8x8xf32>
    %188 = arith.mulf %183, %187 : vector<8x8xf32>
    %cst_50 = arith.constant dense<0.000000e+00> : vector<8x8xf32>
    %189 = tpu.matmul %188, %175, %cst_50 {dimension_numbers = #tpu.dot_dimension_numbers<[1], [0], [0], [1], [0, 0, 1, 1], [], []>} : vector<8x8xf32>, vector<8x8xf32>, vector<8x8xf32> -> vector<8x8xf32>
    %c32 = arith.constant 32 : index
    %c0_51 = arith.constant 0 : index
    %190 = vector.load %arg3[%c32, %c0_51] : memref<64x8xf32, #tpu.memory_space<vmem>>, vector<8x8xf32>
    tpu.vector_store %arg3[%c32, %c0_51], %189 {strides = array<i32>} : memref<64x8xf32, #tpu.memory_space<vmem>>, vector<8x8xf32>,
    %191 = vector.extract_strided_slice %48 {offsets = [40, 0], sizes = [8, 8], strides = [1, 1]} : vector<64x8xf32> to vector<8x8xf32>
    %192 = vector.extract_strided_slice %74 {offsets = [40, 0], sizes = [8, 8], strides = [1, 1]} : vector<64x8xf32> to vector<8x8xf32>
    %193 = vector.extract_strided_slice %100 {offsets = [40, 0], sizes = [8, 8], strides = [1, 1]} : vector<64x8xf32> to vector<8x8xf32>
    %cst_52 = arith.constant dense<0.000000e+00> : vector<8x8xf32>
    %194 = tpu.matmul %191, %192, %cst_52 {dimension_numbers = #tpu.dot_dimension_numbers<[1], [1], [0], [0], [0, 0, 1, 0], [], []>} : vector<8x8xf32>, vector<8x8xf32>, vector<8x8xf32> -> vector<8x8xf32>
    %cst_53 = arith.constant 0.176776692 : f32
    %195 = vector.broadcast %cst_53 : f32 to vector<8x8xf32>
    %196 = arith.mulf %194, %195 : vector<8x8xf32>
    %cst_54 = arith.constant dense<0xFF800000> : vector<8xf32>
    %197 = vector.multi_reduction <maximumf>, %196, %cst_54 [1] : vector<8x8xf32> to vector<8xf32>
    %198 = vector.shape_cast %197 : vector<8xf32> to vector<8x1xf32>
    %199 = vector.broadcast %198 : vector<8x1xf32> to vector<8x8xf32>
    %200 = arith.subf %196, %199 : vector<8x8xf32>
    %201 = math.exp %200 : vector<8x8xf32>
    %cst_55 = arith.constant dense<0.000000e+00> : vector<8xf32>
    %202 = vector.multi_reduction <add>, %201, %cst_55 [1] : vector<8x8xf32> to vector<8xf32>
    %203 = vector.shape_cast %202 : vector<8xf32> to vector<8x1xf32>
    %204 = tpu.reciprocal %203 {approx = true} : vector<8x1xf32> -> vector<8x1xf32>
    %205 = vector.broadcast %204 : vector<8x1xf32> to vector<8x8xf32>
    %206 = arith.mulf %201, %205 : vector<8x8xf32>
    %cst_56 = arith.constant dense<0.000000e+00> : vector<8x8xf32>
    %207 = tpu.matmul %206, %193, %cst_56 {dimension_numbers = #tpu.dot_dimension_numbers<[1], [0], [0], [1], [0, 0, 1, 1], [], []>} : vector<8x8xf32>, vector<8x8xf32>, vector<8x8xf32> -> vector<8x8xf32>
    %c40 = arith.constant 40 : index
    %c0_57 = arith.constant 0 : index
    %208 = vector.load %arg3[%c40, %c0_57] : memref<64x8xf32, #tpu.memory_space<vmem>>, vector<8x8xf32>
    tpu.vector_store %arg3[%c40, %c0_57], %207 {strides = array<i32>} : memref<64x8xf32, #tpu.memory_space<vmem>>, vector<8x8xf32>,
    %209 = vector.extract_strided_slice %48 {offsets = [48, 0], sizes = [8, 8], strides = [1, 1]} : vector<64x8xf32> to vector<8x8xf32>
    %210 = vector.extract_strided_slice %74 {offsets = [48, 0], sizes = [8, 8], strides = [1, 1]} : vector<64x8xf32> to vector<8x8xf32>
    %211 = vector.extract_strided_slice %100 {offsets = [48, 0], sizes = [8, 8], strides = [1, 1]} : vector<64x8xf32> to vector<8x8xf32>
    %cst_58 = arith.constant dense<0.000000e+00> : vector<8x8xf32>
    %212 = tpu.matmul %209, %210, %cst_58 {dimension_numbers = #tpu.dot_dimension_numbers<[1], [1], [0], [0], [0, 0, 1, 0], [], []>} : vector<8x8xf32>, vector<8x8xf32>, vector<8x8xf32> -> vector<8x8xf32>
    %cst_59 = arith.constant 0.176776692 : f32
    %213 = vector.broadcast %cst_59 : f32 to vector<8x8xf32>
    %214 = arith.mulf %212, %213 : vector<8x8xf32>
    %cst_60 = arith.constant dense<0xFF800000> : vector<8xf32>
    %215 = vector.multi_reduction <maximumf>, %214, %cst_60 [1] : vector<8x8xf32> to vector<8xf32>
    %216 = vector.shape_cast %215 : vector<8xf32> to vector<8x1xf32>
    %217 = vector.broadcast %216 : vector<8x1xf32> to vector<8x8xf32>
    %218 = arith.subf %214, %217 : vector<8x8xf32>
    %219 = math.exp %218 : vector<8x8xf32>
    %cst_61 = arith.constant dense<0.000000e+00> : vector<8xf32>
    %220 = vector.multi_reduction <add>, %219, %cst_61 [1] : vector<8x8xf32> to vector<8xf32>
    %221 = vector.shape_cast %220 : vector<8xf32> to vector<8x1xf32>
    %222 = tpu.reciprocal %221 {approx = true} : vector<8x1xf32> -> vector<8x1xf32>
    %223 = vector.broadcast %222 : vector<8x1xf32> to vector<8x8xf32>
    %224 = arith.mulf %219, %223 : vector<8x8xf32>
    %cst_62 = arith.constant dense<0.000000e+00> : vector<8x8xf32>
    %225 = tpu.matmul %224, %211, %cst_62 {dimension_numbers = #tpu.dot_dimension_numbers<[1], [0], [0], [1], [0, 0, 1, 1], [], []>} : vector<8x8xf32>, vector<8x8xf32>, vector<8x8xf32> -> vector<8x8xf32>
    %c48 = arith.constant 48 : index
    %c0_63 = arith.constant 0 : index
    %226 = vector.load %arg3[%c48, %c0_63] : memref<64x8xf32, #tpu.memory_space<vmem>>, vector<8x8xf32>
    tpu.vector_store %arg3[%c48, %c0_63], %225 {strides = array<i32>} : memref<64x8xf32, #tpu.memory_space<vmem>>, vector<8x8xf32>,
    %227 = vector.extract_strided_slice %48 {offsets = [56, 0], sizes = [8, 8], strides = [1, 1]} : vector<64x8xf32> to vector<8x8xf32>
    %228 = vector.extract_strided_slice %74 {offsets = [56, 0], sizes = [8, 8], strides = [1, 1]} : vector<64x8xf32> to vector<8x8xf32>
    %229 = vector.extract_strided_slice %100 {offsets = [56, 0], sizes = [8, 8], strides = [1, 1]} : vector<64x8xf32> to vector<8x8xf32>
    %cst_64 = arith.constant dense<0.000000e+00> : vector<8x8xf32>
    %230 = tpu.matmul %227, %228, %cst_64 {dimension_numbers = #tpu.dot_dimension_numbers<[1], [1], [0], [0], [0, 0, 1, 0], [], []>} : vector<8x8xf32>, vector<8x8xf32>, vector<8x8xf32> -> vector<8x8xf32>
    %cst_65 = arith.constant 0.176776692 : f32
    %231 = vector.broadcast %cst_65 : f32 to vector<8x8xf32>
    %232 = arith.mulf %230, %231 : vector<8x8xf32>
    %cst_66 = arith.constant dense<0xFF800000> : vector<8xf32>
    %233 = vector.multi_reduction <maximumf>, %232, %cst_66 [1] : vector<8x8xf32> to vector<8xf32>
    %234 = vector.shape_cast %233 : vector<8xf32> to vector<8x1xf32>
    %235 = vector.broadcast %234 : vector<8x1xf32> to vector<8x8xf32>
    %236 = arith.subf %232, %235 : vector<8x8xf32>
    %237 = math.exp %236 : vector<8x8xf32>
    %cst_67 = arith.constant dense<0.000000e+00> : vector<8xf32>
    %238 = vector.multi_reduction <add>, %237, %cst_67 [1] : vector<8x8xf32> to vector<8xf32>
    %239 = vector.shape_cast %238 : vector<8xf32> to vector<8x1xf32>
    %240 = tpu.reciprocal %239 {approx = true} : vector<8x1xf32> -> vector<8x1xf32>
    %241 = vector.broadcast %240 : vector<8x1xf32> to vector<8x8xf32>
    %242 = arith.mulf %237, %241 : vector<8x8xf32>
    %cst_68 = arith.constant dense<0.000000e+00> : vector<8x8xf32>
    %243 = tpu.matmul %242, %229, %cst_68 {dimension_numbers = #tpu.dot_dimension_numbers<[1], [0], [0], [1], [0, 0, 1, 1], [], []>} : vector<8x8xf32>, vector<8x8xf32>, vector<8x8xf32> -> vector<8x8xf32>
    %c56 = arith.constant 56 : index
    %c0_69 = arith.constant 0 : index
    %244 = vector.load %arg3[%c56, %c0_69] : memref<64x8xf32, #tpu.memory_space<vmem>>, vector<8x8xf32>
    tpu.vector_store %arg3[%c56, %c0_69], %243 {strides = array<i32>} : memref<64x8xf32, #tpu.memory_space<vmem>>, vector<8x8xf32>,
    return
  }
}

</mosaic_0001>

<llo_original>
// kernel: encoder_forward.3
$region0: #{encoder_forward.3}
  #allocation0 [shape = 'u32[]', space=smem, size = 0x4, offset = 0x4, fixed_abs, tag = 'smem constant byte address 0x4 - core index']
  #allocation1 [shape = 'u32[144,128]{1,0:T(1,128)}', space=vmem, size = 0x12000, scoped, tag = 'internal scratch']
  %s0 = inlined_call_operand.vmem [shape: f32[16,32], index: 0, kind: input, shape index: {}]
  %s1 = inlined_call_operand.vmem [shape: f32[16,32], index: 1, kind: input, shape index: {}]
  %s2 = inlined_call_operand.vmem [shape: f32[32,32], index: 2, kind: input, shape index: {}]
  %s3 = inlined_call_operand.vmem [shape: f32[1,32], index: 3, kind: input, shape index: {}]
  %s4 = inlined_call_operand.vmem [shape: f32[32,64], index: 4, kind: input, shape index: {}]
  %s5 = inlined_call_operand.vmem [shape: f32[1,64], index: 5, kind: input, shape index: {}]
  %s6 = inlined_call_operand.vmem [shape: f32[64,32], index: 6, kind: input, shape index: {}]
  %s7 = inlined_call_operand.vmem [shape: f32[1,32], index: 7, kind: input, shape index: {}]
  %s8 = inlined_call_operand.hbm [shape: f32[16,32], index: 8, kind: output, shape index: {}]
  %s9 = sld [smem:[#allocation0]]
  $region42: #{encoder_forward.3} parent=0
    _
  %s11 = ssub.s32 1, %s9
  %s12 = scalar_select 0, %s11, %s9
  $region1: #{encoder_forward.3} parent=0
    #allocation2 [shape = 'u8[8192]{0}', space=vmem, size = 0x2000, scoped, tag = 'output window, operand 0, single buffered']
    #allocation3 [shape = 's32[1]{0}', space=sflag, size = 0x4, scoped, tag = 'scoped memory for encoder_forward.3']
    %13 = vsyncpa [#allocation3], 0
    // Predicated region
    $region2: #{encoder_forward.3} parent=1 // pred_check
      _
    $region3: #{encoder_forward.3} parent=1 // pred_check_branch
      %15 = sbr.rel (0) target = $region5
    $region4: #{encoder_forward.3} parent=1 // pred_region
      _
    $region5: #{encoder_forward.3} parent=1 // pred_fallthru
      _
    // Predicated region
    $region6: #{encoder_forward.3} parent=1 // pred_check
      _
    $region7: #{encoder_forward.3} parent=1 // pred_check_branch
      %17 = sbr.rel (0) target = $region9
    $region8: #{encoder_forward.3} parent=1 // pred_region
      _
    $region9: #{encoder_forward.3} parent=1 // pred_fallthru
      _
    // Predicated region
    $region10: #{encoder_forward.3} parent=1 // pred_check
      _
    $region11: #{encoder_forward.3} parent=1 // pred_check_branch
      %19 = sbr.rel (0) target = $region13
    $region12: #{encoder_forward.3} parent=1 // pred_region
      _
    $region13: #{encoder_forward.3} parent=1 // pred_fallthru
      _
    // Predicated region
    $region14: #{encoder_forward.3} parent=1 // pred_check
      _
    $region15: #{encoder_forward.3} parent=1 // pred_check_branch
      %21 = sbr.rel (0) target = $region17
    $region16: #{encoder_forward.3} parent=1 // pred_region
      _
    $region17: #{encoder_forward.3} parent=1 // pred_fallthru
      _
    // Predicated region
    $region18: #{encoder_forward.3} parent=1 // pred_check
      _
    $region19: #{encoder_forward.3} parent=1 // pred_check_branch
      %23 = sbr.rel (0) target = $region21
    $region20: #{encoder_forward.3} parent=1 // pred_region
      _
    $region21: #{encoder_forward.3} parent=1 // pred_fallthru
      _
    // Predicated region
    $region22: #{encoder_forward.3} parent=1 // pred_check
      _
    $region23: #{encoder_forward.3} parent=1 // pred_check_branch
      %25 = sbr.rel (0) target = $region25
    $region24: #{encoder_forward.3} parent=1 // pred_region
      _
    $region25: #{encoder_forward.3} parent=1 // pred_fallthru
      _
    // Predicated region
    $region26: #{encoder_forward.3} parent=1 // pred_check
      _
    $region27: #{encoder_forward.3} parent=1 // pred_check_branch
      %27 = sbr.rel (0) target = $region29
    $region28: #{encoder_forward.3} parent=1 // pred_region
      _
    $region29: #{encoder_forward.3} parent=1 // pred_fallthru
      _
    // Predicated region
    $region30: #{encoder_forward.3} parent=1 // pred_check
      _
    $region31: #{encoder_forward.3} parent=1 // pred_check_branch
      %29 = sbr.rel (0) target = $region33
    $region32: #{encoder_forward.3} parent=1 // pred_region
      _
    $region33: #{encoder_forward.3} parent=1 // pred_fallthru
      _
    %v30 = vld [vmem:[%s0] sm:$0xff]
    %v31 = vld [vmem:[%s0 + $0x8] sm:$0xff]
    %v32 = vld [vmem:[%s1] sm:$0xff]
    %v33 = vld [vmem:[%s1 + $0x8] sm:$0xff]
    %v34 = vld [vmem:[%s2] sm:$0xff]
    %v35 = vld [vmem:[%s2 + $0x8] sm:$0xff]
    %v36 = vld [vmem:[%s2 + $0x10] sm:$0xff]
    %v37 = vld [vmem:[%s2 + $0x18] sm:$0xff]
    %v38 = vld [vmem:[%s3] sm:$0x1]
    %v40 = vlaneseq
    %v41 = vshrl.u32 %v40, 7
    %v42 = vsub.s32 0, %v41
    %v43 = vrot.slane %v38, %v42
    %vm45 = vcmask 261120
    %v47 = vsel %vm45, %v32, 0
    %v50 = vsel %vm45, %v33, 0
    %52 = vmatprep.subr.mxu0 0.0
    %53 = vmatpush1.msra.mxu0 %v34
    %54 = vmatprep.subr.mxu0 0.0
    %55 = vmatpush1.msra.mxu0 %v35
    %56 = vmatprep.subr.mxu0 0.0
    %57 = vmatpush1.msra.mxu0 %v36
    %58 = vmatprep.subr.mxu0 0.0
    %59 = vmatpush1.msra.mxu0 %v37
    %60 = vmatprep.subr.mxu0 0.0
    %61 = vmatpush1.msra.mxu0 0.0
    %62 = vmatprep.subr.mxu0 0.0
    %63 = vmatpush1.msra.mxu0 0.0
    %64 = vmatprep.subr.mxu0 0.0
    %65 = vmatpush1.msra.mxu0 0.0
    %66 = vmatprep.subr.mxu0 0.0
    %67 = vmatpush1.msra.mxu0 0.0
    %68 = vmatprep.subr.mxu0 0.0
    %69 = vmatpush1.msra.mxu0 0.0
    %70 = vmatprep.subr.mxu0 0.0
    %71 = vmatpush1.msra.mxu0 0.0
    %72 = vmatprep.subr.mxu0 0.0
    %73 = vmatpush1.msra.mxu0 0.0
    %74 = vmatprep.subr.mxu0 0.0
    %75 = vmatpush1.msra.mxu0 0.0
    %76 = vmatprep.subr.mxu0 0.0
    %77 = vmatpush1.msra.mxu0 0.0
    %78 = vmatprep.subr.mxu0 0.0
    %79 = vmatpush1.msra.mxu0 0.0
    %80 = vmatprep.subr.mxu0 0.0
    %81 = vmatpush1.msra.mxu0 0.0
    %82 = vmatprep.subr.mxu0 0.0
    %83 = vmatpush1.msra.mxu0 0.0
    %84 = vmatprep.subr.mxu0 0.0
    %85 = vmatpush1.msra.mxu0 0.0
    %86 = vmatprep.subr.mxu0 0.0
    %87 = vmatpush1.msra.mxu0 0.0
    %88 = vmatprep.subr.mxu0 0.0
    %89 = vmatpush1.msra.mxu0 0.0
    %90 = vmatprep.subr.mxu0 0.0
    %91 = vmatpush1.msra.mxu0 0.0
    %92 = vmatprep.subr.mxu0 0.0
    %93 = vmatpush1.msra.mxu0 0.0
    %94 = vmatprep.subr.mxu0 0.0
    %95 = vmatpush1.msra.mxu0 0.0
    %96 = vmatprep.subr.mxu0 0.0
    %97 = vmatpush1.msra.mxu0 0.0
    %98 = vmatprep.subr.mxu0 0.0
    %99 = vmatpush1.msra.mxu0 0.0
    %100 = vmatprep.subr.mxu0 0.0
    %101 = vmatpush1.msra.mxu0 0.0
    %102 = vmatprep.subr.mxu0 0.0
    %103 = vmatpush1.msra.mxu0 0.0
    %104 = vmatprep.subr.mxu0 0.0
    %105 = vmatpush1.msra.mxu0 0.0
    %106 = vmatprep.subr.mxu0 0.0
    %107 = vmatpush1.msra.mxu0 0.0
    %108 = vmatprep.subr.mxu0 0.0
    %109 = vmatpush1.msra.mxu0 0.0
    %110 = vmatprep.subr.mxu0 0.0
    %111 = vmatpush1.msra.mxu0 0.0
    %112 = vmatprep.subr.mxu0 0.0
    %113 = vmatpush1.msra.mxu0 0.0
    %114 = vmatprep.subr.mxu0 0.0
    %115 = vmatpush1.msra.mxu0 0.0
    %116 = vmatprep.mubr.f32.mxu0 0.0
    %117 = vmatmul.mubr.f32.gmra.mrb[0].mxu0 %v47
    %v118 = vpop.f32.mrb[0].mxu0
    %v119 = vadd.f32 %v43, %v118
    %v120 = vpop.f32.mrb[0].mxu0
    %121 = vmatprep.mubr.f32.mxu0 0.0
    %122 = vmatmul.mubr.f32.gmra.mrb[0].mxu0 %v50
    %v123 = vpop.f32.mrb[0].mxu0
    %v124 = vadd.f32 %v43, %v123
    %v125 = vpop.f32.mrb[0].mxu0
    %126 = vdwg.mxu0
    %v127 = vadd.f32 %v30, %v119
    %v128 = vadd.f32 %v31, %v124
    %v129 = vsel %vm45, %v127, 0.0
    %130 = vadd.xlane.f32.xlu0 %v129
    %v131 = vpop.xlane.xlu0 %130
    %v132 = vrot.slane %v131, 4
    %v133 = vadd.f32 %v131, %v132
    %v134 = vrot.slane %v133, 2
    %v135 = vadd.f32 %v133, %v134
    %v136 = vrot.slane %v135, 1
    %v137 = vadd.f32 %v135, %v136
    %s138 = vtos %v137
    %v139 = vrcp.pop 256.0
    %s140 = vtos %v139
    %s141 = smul.f32 %s138, %s140
    %v142 = vstv %s141
    %v143 = vsub.f32 %v127, %v142
    %v144 = vmul.f32 %v143, %v143
    %v145 = vsel %vm45, %v144, 0.0
    %146 = vadd.xlane.f32.xlu0 %v145
    %v147 = vpop.xlane.xlu0 %146
    %v148 = vrot.slane %v147, 4
    %v149 = vadd.f32 %v147, %v148
    %v150 = vrot.slane %v149, 2
    %v151 = vadd.f32 %v149, %v150
    %v152 = vrot.slane %v151, 1
    %v153 = vadd.f32 %v151, %v152
    %s154 = vtos %v153
    %v155 = vrcp.pop 256.0
    %s156 = vtos %v155
    %s157 = smul.f32 %s154, %s156
    %s158 = sadd.f32 %s157, 1e-05
    %v159 = vstv %s158
    %v160 = vrsqrt.pop %v159
    %s161 = vtos %v160
    %v162 = vstv %s161
    %v163 = vmul.f32 %v143, %v162
    %v164 = vsel %vm45, %v128, 0.0
    %165 = vadd.xlane.f32.xlu0 %v164
    %v166 = vpop.xlane.xlu0 %165
    %v167 = vrot.slane %v166, 4
    %v168 = vadd.f32 %v166, %v167
    %v169 = vrot.slane %v168, 2
    %v170 = vadd.f32 %v168, %v169
    %v171 = vrot.slane %v170, 1
    %v172 = vadd.f32 %v170, %v171
    %s173 = vtos %v172
    %v174 = vrcp.pop 256.0
    %s175 = vtos %v174
    %s176 = smul.f32 %s173, %s175
    %v177 = vstv %s176
    %v178 = vsub.f32 %v128, %v177
    %v179 = vmul.f32 %v178, %v178
    %v180 = vsel %vm45, %v179, 0.0
    %181 = vadd.xlane.f32.xlu0 %v180
    %v182 = vpop.xlane.xlu0 %181
    %v183 = vrot.slane %v182, 4
    %v184 = vadd.f32 %v182, %v183
    %v185 = vrot.slane %v184, 2
    %v186 = vadd.f32 %v184, %v185
    %v187 = vrot.slane %v186, 1
    %v188 = vadd.f32 %v186, %v187
    %s189 = vtos %v188
    %v190 = vrcp.pop 256.0
    %s191 = vtos %v190
    %s192 = smul.f32 %s189, %s191
    %s193 = sadd.f32 %s192, 1e-05
    %v194 = vstv %s193
    %v195 = vrsqrt.pop %v194
    %s196 = vtos %v195
    %v197 = vstv %s196
    %v198 = vmul.f32 %v178, %v197
    %v199 = vld [vmem:[%s4] sm:$0xff]
    %v200 = vld [vmem:[%s4 + $0x8] sm:$0xff]
    %v201 = vld [vmem:[%s4 + $0x10] sm:$0xff]
    %v202 = vld [vmem:[%s4 + $0x18] sm:$0xff]
    %v203 = vld [vmem:[%s5] sm:$0x1]
    %v205 = vlaneseq
    %v206 = vshrl.u32 %v205, 7
    %v207 = vsub.s32 0, %v206
    %v208 = vrot.slane %v203, %v207
    %v211 = vsel %vm45, %v163, 0
    %v214 = vsel %vm45, %v198, 0
    %216 = vmatprep.subr.mxu0 0.0
    %217 = vmatpush1.msra.mxu0 %v199
    %218 = vmatprep.subr.mxu0 0.0
    %219 = vmatpush1.msra.mxu0 %v200
    %220 = vmatprep.subr.mxu0 0.0
    %221 = vmatpush1.msra.mxu0 %v201
    %222 = vmatprep.subr.mxu0 0.0
    %223 = vmatpush1.msra.mxu0 %v202
    %224 = vmatprep.subr.mxu0 0.0
    %225 = vmatpush1.msra.mxu0 0.0
    %226 = vmatprep.subr.mxu0 0.0
    %227 = vmatpush1.msra.mxu0 0.0
    %228 = vmatprep.subr.mxu0 0.0
    %229 = vmatpush1.msra.mxu0 0.0
    %230 = vmatprep.subr.mxu0 0.0
    %231 = vmatpush1.msra.mxu0 0.0
    %232 = vmatprep.subr.mxu0 0.0
    %233 = vmatpush1.msra.mxu0 0.0
    %234 = vmatprep.subr.mxu0 0.0
    %235 = vmatpush1.msra.mxu0 0.0
    %236 = vmatprep.subr.mxu0 0.0
    %237 = vmatpush1.msra.mxu0 0.0
    %238 = vmatprep.subr.mxu0 0.0
    %239 = vmatpush1.msra.mxu0 0.0
    %240 = vmatprep.subr.mxu0 0.0
    %241 = vmatpush1.msra.mxu0 0.0
    %242 = vmatprep.subr.mxu0 0.0
    %243 = vmatpush1.msra.mxu0 0.0
    %244 = vmatprep.subr.mxu0 0.0
    %245 = vmatpush1.msra.mxu0 0.0
    %246 = vmatprep.subr.mxu0 0.0
    %247 = vmatpush1.msra.mxu0 0.0
    %248 = vmatprep.subr.mxu0 0.0
    %249 = vmatpush1.msra.mxu0 0.0
    %250 = vmatprep.subr.mxu0 0.0
    %251 = vmatpush1.msra.mxu0 0.0
    %252 = vmatprep.subr.mxu0 0.0
    %253 = vmatpush1.msra.mxu0 0.0
    %254 = vmatprep.subr.mxu0 0.0
    %255 = vmatpush1.msra.mxu0 0.0
    %256 = vmatprep.subr.mxu0 0.0
    %257 = vmatpush1.msra.mxu0 0.0
    %258 = vmatprep.subr.mxu0 0.0
    %259 = vmatpush1.msra.mxu0 0.0
    %260 = vmatprep.subr.mxu0 0.0
    %261 = vmatpush1.msra.mxu0 0.0
    %262 = vmatprep.subr.mxu0 0.0
    %263 = vmatpush1.msra.mxu0 0.0
    %264 = vmatprep.subr.mxu0 0.0
    %265 = vmatpush1.msra.mxu0 0.0
    %266 = vmatprep.subr.mxu0 0.0
    %267 = vmatpush1.msra.mxu0 0.0
    %268 = vmatprep.subr.mxu0 0.0
    %269 = vmatpush1.msra.mxu0 0.0
    %270 = vmatprep.subr.mxu0 0.0
    %271 = vmatpush1.msra.mxu0 0.0
    %272 = vmatprep.subr.mxu0 0.0
    %273 = vmatpush1.msra.mxu0 0.0
    %274 = vmatprep.subr.mxu0 0.0
    %275 = vmatpush1.msra.mxu0 0.0
    %276 = vmatprep.subr.mxu0 0.0
    %277 = vmatpush1.msra.mxu0 0.0
    %278 = vmatprep.subr.mxu0 0.0
    %279 = vmatpush1.msra.mxu0 0.0
    %280 = vmatprep.mubr.f32.mxu0 0.0
    %281 = vmatmul.mubr.f32.gmra.mrb[0].mxu0 %v211
    %v282 = vpop.f32.mrb[0].mxu0
    %v283 = vadd.f32 %v208, %v282
    %v284 = vpop.f32.mrb[0].mxu0
    %285 = vmatprep.mubr.f32.mxu0 0.0
    %286 = vmatmul.mubr.f32.gmra.mrb[0].mxu0 %v214
    %v287 = vpop.f32.mrb[0].mxu0
    %v288 = vadd.f32 %v208, %v287
    %v289 = vpop.f32.mrb[0].mxu0
    %290 = vdwg.mxu0
    %v291 = vmax.f32 %v283, 0.0
    %v292 = vmax.f32 %v288, 0.0
    %v293 = vld [vmem:[%s6] sm:$0xff]
    %v294 = vld [vmem:[%s6 + $0x8] sm:$0xff]
    %v295 = vld [vmem:[%s6 + $0x10] sm:$0xff]
    %v296 = vld [vmem:[%s6 + $0x18] sm:$0xff]
    %v297 = vld [vmem:[%s6 + $0x20] sm:$0xff]
    %v298 = vld [vmem:[%s6 + $0x28] sm:$0xff]
    %v299 = vld [vmem:[%s6 + $0x30] sm:$0xff]
    %v300 = vld [vmem:[%s6 + $0x38] sm:$0xff]
    %v301 = vld [vmem:[%s7] sm:$0x1]
    %v303 = vlaneseq
    %v304 = vshrl.u32 %v303, 7
    %v305 = vsub.s32 0, %v304
    %v306 = vrot.slane %v301, %v305
    %vm308 = vcmask 523264
    %v310 = vsel %vm308, %v291, 0
    %v313 = vsel %vm308, %v292, 0
    %315 = vmatprep.subr.mxu0 0.0
    %316 = vmatpush1.msra.mxu0 %v293
    %317 = vmatprep.subr.mxu0 0.0
    %318 = vmatpush1.msra.mxu0 %v294
    %319 = vmatprep.subr.mxu0 0.0
    %320 = vmatpush1.msra.mxu0 %v295
    %321 = vmatprep.subr.mxu0 0.0
    %322 = vmatpush1.msra.mxu0 %v296
    %323 = vmatprep.subr.mxu0 0.0
    %324 = vmatpush1.msra.mxu0 %v297
    %325 = vmatprep.subr.mxu0 0.0
    %326 = vmatpush1.msra.mxu0 %v298
    %327 = vmatprep.subr.mxu0 0.0
    %328 = vmatpush1.msra.mxu0 %v299
    %329 = vmatprep.subr.mxu0 0.0
    %330 = vmatpush1.msra.mxu0 %v300
    %331 = vmatprep.subr.mxu0 0.0
    %332 = vmatpush1.msra.mxu0 0.0
    %333 = vmatprep.subr.mxu0 0.0
    %334 = vmatpush1.msra.mxu0 0.0
    %335 = vmatprep.subr.mxu0 0.0
    %336 = vmatpush1.msra.mxu0 0.0
    %337 = vmatprep.subr.mxu0 0.0
    %338 = vmatpush1.msra.mxu0 0.0
    %339 = vmatprep.subr.mxu0 0.0
    %340 = vmatpush1.msra.mxu0 0.0
    %341 = vmatprep.subr.mxu0 0.0
    %342 = vmatpush1.msra.mxu0 0.0
    %343 = vmatprep.subr.mxu0 0.0
    %344 = vmatpush1.msra.mxu0 0.0
    %345 = vmatprep.subr.mxu0 0.0
    %346 = vmatpush1.msra.mxu0 0.0
    %347 = vmatprep.subr.mxu0 0.0
    %348 = vmatpush1.msra.mxu0 0.0
    %349 = vmatprep.subr.mxu0 0.0
    %350 = vmatpush1.msra.mxu0 0.0
    %351 = vmatprep.subr.mxu0 0.0
    %352 = vmatpush1.msra.mxu0 0.0
    %353 = vmatprep.subr.mxu0 0.0
    %354 = vmatpush1.msra.mxu0 0.0
    %355 = vmatprep.subr.mxu0 0.0
    %356 = vmatpush1.msra.mxu0 0.0
    %357 = vmatprep.subr.mxu0 0.0
    %358 = vmatpush1.msra.mxu0 0.0
    %359 = vmatprep.subr.mxu0 0.0
    %360 = vmatpush1.msra.mxu0 0.0
    %361 = vmatprep.subr.mxu0 0.0
    %362 = vmatpush1.msra.mxu0 0.0
    %363 = vmatprep.subr.mxu0 0.0
    %364 = vmatpush1.msra.mxu0 0.0
    %365 = vmatprep.subr.mxu0 0.0
    %366 = vmatpush1.msra.mxu0 0.0
    %367 = vmatprep.subr.mxu0 0.0
    %368 = vmatpush1.msra.mxu0 0.0
    %369 = vmatprep.subr.mxu0 0.0
    %370 = vmatpush1.msra.mxu0 0.0
    %371 = vmatprep.subr.mxu0 0.0
    %372 = vmatpush1.msra.mxu0 0.0
    %373 = vmatprep.subr.mxu0 0.0
    %374 = vmatpush1.msra.mxu0 0.0
    %375 = vmatprep.subr.mxu0 0.0
    %376 = vmatpush1.msra.mxu0 0.0
    %377 = vmatprep.subr.mxu0 0.0
    %378 = vmatpush1.msra.mxu0 0.0
    %379 = vmatprep.mubr.f32.mxu0 0.0
    %380 = vmatmul.mubr.f32.gmra.mrb[0].mxu0 %v310
    %v381 = vpop.f32.mrb[0].mxu0
    %v382 = vadd.f32 %v306, %v381
    %v383 = vpop.f32.mrb[0].mxu0
    %384 = vmatprep.mubr.f32.mxu0 0.0
    %385 = vmatmul.mubr.f32.gmra.mrb[0].mxu0 %v313
    %v386 = vpop.f32.mrb[0].mxu0
    %v387 = vadd.f32 %v306, %v386
    %v388 = vpop.f32.mrb[0].mxu0
    %389 = vdwg.mxu0
    %v390 = vadd.f32 %v163, %v382
    %v391 = vadd.f32 %v198, %v387
    %v392 = vsel %vm45, %v390, 0.0
    %393 = vadd.xlane.f32.xlu0 %v392
    %v394 = vpop.xlane.xlu0 %393
    %v395 = vrot.slane %v394, 4
    %v396 = vadd.f32 %v394, %v395
    %v397 = vrot.slane %v396, 2
    %v398 = vadd.f32 %v396, %v397
    %v399 = vrot.slane %v398, 1
    %v400 = vadd.f32 %v398, %v399
    %s401 = vtos %v400
    %v402 = vrcp.pop 256.0
    %s403 = vtos %v402
    %s404 = smul.f32 %s401, %s403
    %v405 = vstv %s404
    %v406 = vsub.f32 %v390, %v405
    %v407 = vmul.f32 %v406, %v406
    %v408 = vsel %vm45, %v407, 0.0
    %409 = vadd.xlane.f32.xlu0 %v408
    %v410 = vpop.xlane.xlu0 %409
    %v411 = vrot.slane %v410, 4
    %v412 = vadd.f32 %v410, %v411
    %v413 = vrot.slane %v412, 2
    %v414 = vadd.f32 %v412, %v413
    %v415 = vrot.slane %v414, 1
    %v416 = vadd.f32 %v414, %v415
    %s417 = vtos %v416
    %v418 = vrcp.pop 256.0
    %s419 = vtos %v418
    %s420 = smul.f32 %s417, %s419
    %s421 = sadd.f32 %s420, 1e-05
    %v422 = vstv %s421
    %v423 = vrsqrt.pop %v422
    %s424 = vtos %v423
    %v425 = vstv %s424
    %v426 = vmul.f32 %v406, %v425
    %v427 = vsel %vm45, %v391, 0.0
    %428 = vadd.xlane.f32.xlu0 %v427
    %v429 = vpop.xlane.xlu0 %428
    %v430 = vrot.slane %v429, 4
    %v431 = vadd.f32 %v429, %v430
    %v432 = vrot.slane %v431, 2
    %v433 = vadd.f32 %v431, %v432
    %v434 = vrot.slane %v433, 1
    %v435 = vadd.f32 %v433, %v434
    %s436 = vtos %v435
    %v437 = vrcp.pop 256.0
    %s438 = vtos %v437
    %s439 = smul.f32 %s436, %s438
    %v440 = vstv %s439
    %v441 = vsub.f32 %v391, %v440
    %v442 = vmul.f32 %v441, %v441
    %v443 = vsel %vm45, %v442, 0.0
    %444 = vadd.xlane.f32.xlu0 %v443
    %v445 = vpop.xlane.xlu0 %444
    %v446 = vrot.slane %v445, 4
    %v447 = vadd.f32 %v445, %v446
    %v448 = vrot.slane %v447, 2
    %v449 = vadd.f32 %v447, %v448
    %v450 = vrot.slane %v449, 1
    %v451 = vadd.f32 %v449, %v450
    %s452 = vtos %v451
    %v453 = vrcp.pop 256.0
    %s454 = vtos %v453
    %s455 = smul.f32 %s452, %s454
    %s456 = sadd.f32 %s455, 1e-05
    %v457 = vstv %s456
    %v458 = vrsqrt.pop %v457
    %s459 = vtos %v458
    %v460 = vstv %s459
    %v461 = vmul.f32 %v441, %v460
    %462 = vst.msk [vmem:[#allocation2] sm:$0xff] %vm45, %v426
    %463 = vst.msk [vmem:[#allocation2 + $0x8] sm:$0xff] %vm45, %v461
    // Predicated region
    $region34: #{encoder_forward.3} parent=1 // pred_check
      _
    $region35: #{encoder_forward.3} parent=1 // pred_check_branch
      %465 = sbr.rel (0) target = $region37
    $region36: #{encoder_forward.3} parent=1 // pred_region
      %s467 = ssub.s32 256, 256
      %468 = vsyncadd [#allocation3], %s467
      %s469 = sshll.u32 [#allocation2], 4
      %s470 = int_to_ptr.vmem [resolvable:$true] %s469
      %475 = dma.vmem_to_hbm [thread:$0]  %s470, 256, %s8, [#allocation3], 128, 128, 8
    $region37: #{encoder_forward.3} parent=1 // pred_fallthru
      _
    // Predicated region
    $region38: #{encoder_forward.3} parent=1 // pred_check
      _
    $region39: #{encoder_forward.3} parent=1 // pred_check_branch
      %477 = sbr.rel (0) target = $region41
    $region40: #{encoder_forward.3} parent=1 // pred_region
      %478 = dma.done [#allocation3], 256
    $region41: #{encoder_forward.3} parent=1 // pred_fallthru
      _
    %479 = vsyncpa [#allocation3], 1

// kernel: encoder_forward.2
$region0: #{encoder_forward.2}
  #allocation0 [shape = 'u32[]', space=smem, size = 0x4, offset = 0x4, fixed_abs, tag = 'smem constant byte address 0x4 - core index']
  #allocation1 [shape = 'u32[144,128]{1,0:T(1,128)}', space=vmem, size = 0x12000, scoped, tag = 'internal scratch']
  %s0 = inlined_call_operand.vmem [shape: f32[64,32], index: 0, kind: input, shape index: {}]
  %s1 = inlined_call_operand.vmem [shape: f32[32,96], index: 1, kind: input, shape index: {}]
  %s2 = inlined_call_operand.vmem [shape: f32[1,96], index: 2, kind: input, shape index: {}]
  %s3 = inlined_call_operand.vmem [shape: f32[64,8], index: 3, kind: output, shape index: {}]
  %s4 = sld [smem:[#allocation0]]
  $region22: #{encoder_forward.2} parent=0
    _
  %s6 = ssub.s32 1, %s4
  %s7 = scalar_select 0, %s6, %s4
  // Predicated region
  $region2: #{encoder_forward.2} parent=0 // pred_check
    _
  $region3: #{encoder_forward.2} parent=0 // pred_check_branch
    %9 = sbr.rel (0) target = $region5
  $region4: #{encoder_forward.2} parent=0 // pred_region
    _
  $region5: #{encoder_forward.2} parent=0 // pred_fallthru
    _
  // Predicated region
  $region6: #{encoder_forward.2} parent=0 // pred_check
    _
  $region7: #{encoder_forward.2} parent=0 // pred_check_branch
    %11 = sbr.rel (0) target = $region9
  $region8: #{encoder_forward.2} parent=0 // pred_region
    _
  $region9: #{encoder_forward.2} parent=0 // pred_fallthru
    _
  // Predicated region
  $region10: #{encoder_forward.2} parent=0 // pred_check
    _
  $region11: #{encoder_forward.2} parent=0 // pred_check_branch
    %13 = sbr.rel (0) target = $region13
  $region12: #{encoder_forward.2} parent=0 // pred_region
    _
  $region13: #{encoder_forward.2} parent=0 // pred_fallthru
    _
  %v14 = vld [vmem:[%s0] sm:$0xff]
  %v15 = vld [vmem:[%s0 + $0x8] sm:$0xff]
  %v16 = vld [vmem:[%s0 + $0x10] sm:$0xff]
  %v17 = vld [vmem:[%s0 + $0x18] sm:$0xff]
  %v18 = vld [vmem:[%s0 + $0x20] sm:$0xff]
  %v19 = vld [vmem:[%s0 + $0x28] sm:$0xff]
  %v20 = vld [vmem:[%s0 + $0x30] sm:$0xff]
  %v21 = vld [vmem:[%s0 + $0x38] sm:$0xff]
  %v22 = vld [vmem:[%s1] sm:$0xff]
  %v23 = vld [vmem:[%s1 + $0x8] sm:$0xff]
  %v24 = vld [vmem:[%s1 + $0x10] sm:$0xff]
  %v25 = vld [vmem:[%s1 + $0x18] sm:$0xff]
  %v26 = vld [vmem:[%s2] sm:$0x1]
  %v28 = vlaneseq
  %v29 = vshrl.u32 %v28, 7
  %v30 = vsub.s32 0, %v29
  %v31 = vrot.slane %v26, %v30
  %vm33 = vcmask 261120
  %v35 = vsel %vm33, %v14, 0
  %v38 = vsel %vm33, %v15, 0
  %v41 = vsel %vm33, %v16, 0
  %v44 = vsel %vm33, %v17, 0
  %v47 = vsel %vm33, %v18, 0
  %v50 = vsel %vm33, %v19, 0
  %v53 = vsel %vm33, %v20, 0
  %v56 = vsel %vm33, %v21, 0
  %58 = vmatprep.subr.mxu0 0.0
  %59 = vmatpush1.msra.mxu0 %v22
  %60 = vmatprep.subr.mxu0 0.0
  %61 = vmatpush1.msra.mxu0 %v23
  %62 = vmatprep.subr.mxu0 0.0
  %63 = vmatpush1.msra.mxu0 %v24
  %64 = vmatprep.subr.mxu0 0.0
  %65 = vmatpush1.msra.mxu0 %v25
  %66 = vmatprep.subr.mxu0 0.0
  %67 = vmatpush1.msra.mxu0 0.0
  %68 = vmatprep.subr.mxu0 0.0
  %69 = vmatpush1.msra.mxu0 0.0
  %70 = vmatprep.subr.mxu0 0.0
  %71 = vmatpush1.msra.mxu0 0.0
  %72 = vmatprep.subr.mxu0 0.0
  %73 = vmatpush1.msra.mxu0 0.0
  %74 = vmatprep.subr.mxu0 0.0
  %75 = vmatpush1.msra.mxu0 0.0
  %76 = vmatprep.subr.mxu0 0.0
  %77 = vmatpush1.msra.mxu0 0.0
  %78 = vmatprep.subr.mxu0 0.0
  %79 = vmatpush1.msra.mxu0 0.0
  %80 = vmatprep.subr.mxu0 0.0
  %81 = vmatpush1.msra.mxu0 0.0
  %82 = vmatprep.subr.mxu0 0.0
  %83 = vmatpush1.msra.mxu0 0.0
  %84 = vmatprep.subr.mxu0 0.0
  %85 = vmatpush1.msra.mxu0 0.0
  %86 = vmatprep.subr.mxu0 0.0
  %87 = vmatpush1.msra.mxu0 0.0
  %88 = vmatprep.subr.mxu0 0.0
  %89 = vmatpush1.msra.mxu0 0.0
  %90 = vmatprep.subr.mxu0 0.0
  %91 = vmatpush1.msra.mxu0 0.0
  %92 = vmatprep.subr.mxu0 0.0
  %93 = vmatpush1.msra.mxu0 0.0
  %94 = vmatprep.subr.mxu0 0.0
  %95 = vmatpush1.msra.mxu0 0.0
  %96 = vmatprep.subr.mxu0 0.0
  %97 = vmatpush1.msra.mxu0 0.0
  %98 = vmatprep.subr.mxu0 0.0
  %99 = vmatpush1.msra.mxu0 0.0
  %100 = vmatprep.subr.mxu0 0.0
  %101 = vmatpush1.msra.mxu0 0.0
  %102 = vmatprep.subr.mxu0 0.0
  %103 = vmatpush1.msra.mxu0 0.0
  %104 = vmatprep.subr.mxu0 0.0
  %105 = vmatpush1.msra.mxu0 0.0
  %106 = vmatprep.subr.mxu0 0.0
  %107 = vmatpush1.msra.mxu0 0.0
  %108 = vmatprep.subr.mxu0 0.0
  %109 = vmatpush1.msra.mxu0 0.0
  %110 = vmatprep.subr.mxu0 0.0
  %111 = vmatpush1.msra.mxu0 0.0
  %112 = vmatprep.subr.mxu0 0.0
  %113 = vmatpush1.msra.mxu0 0.0
  %114 = vmatprep.subr.mxu0 0.0
  %115 = vmatpush1.msra.mxu0 0.0
  %116 = vmatprep.subr.mxu0 0.0
  %117 = vmatpush1.msra.mxu0 0.0
  %118 = vmatprep.subr.mxu0 0.0
  %119 = vmatpush1.msra.mxu0 0.0
  %120 = vmatprep.subr.mxu0 0.0
  %121 = vmatpush1.msra.mxu0 0.0
  %122 = vmatprep.mubr.f32.mxu0 0.0
  %123 = vmatmul.mubr.f32.gmra.mrb[0].mxu0 %v35
  %v124 = vpop.f32.mrb[0].mxu0
  %v125 = vadd.f32 %v31, %v124
  %v126 = vpop.f32.mrb[0].mxu0
  %127 = vmatprep.mubr.f32.mxu0 0.0
  %128 = vmatmul.mubr.f32.gmra.mrb[0].mxu0 %v38
  %v129 = vpop.f32.mrb[0].mxu0
  %v130 = vadd.f32 %v31, %v129
  %v131 = vpop.f32.mrb[0].mxu0
  %132 = vmatprep.mubr.f32.mxu0 0.0
  %133 = vmatmul.mubr.f32.gmra.mrb[0].mxu0 %v41
  %v134 = vpop.f32.mrb[0].mxu0
  %v135 = vadd.f32 %v31, %v134
  %v136 = vpop.f32.mrb[0].mxu0
  %137 = vmatprep.mubr.f32.mxu0 0.0
  %138 = vmatmul.mubr.f32.gmra.mrb[0].mxu0 %v44
  %v139 = vpop.f32.mrb[0].mxu0
  %v140 = vadd.f32 %v31, %v139
  %v141 = vpop.f32.mrb[0].mxu0
  %142 = vmatprep.mubr.f32.mxu0 0.0
  %143 = vmatmul.mubr.f32.gmra.mrb[0].mxu0 %v47
  %v144 = vpop.f32.mrb[0].mxu0
  %v145 = vadd.f32 %v31, %v144
  %v146 = vpop.f32.mrb[0].mxu0
  %147 = vmatprep.mubr.f32.mxu0 0.0
  %148 = vmatmul.mubr.f32.gmra.mrb[0].mxu0 %v50
  %v149 = vpop.f32.mrb[0].mxu0
  %v150 = vadd.f32 %v31, %v149
  %v151 = vpop.f32.mrb[0].mxu0
  %152 = vmatprep.mubr.f32.mxu0 0.0
  %153 = vmatmul.mubr.f32.gmra.mrb[0].mxu0 %v53
  %v154 = vpop.f32.mrb[0].mxu0
  %v155 = vadd.f32 %v31, %v154
  %v156 = vpop.f32.mrb[0].mxu0
  %157 = vmatprep.mubr.f32.mxu0 0.0
  %158 = vmatmul.mubr.f32.gmra.mrb[0].mxu0 %v56
  %v159 = vpop.f32.mrb[0].mxu0
  %v160 = vadd.f32 %v31, %v159
  %v161 = vpop.f32.mrb[0].mxu0
  %162 = vdwg.mxu0
  %v163 = vlaneseq
  %v164 = vshrl.u32 %v163, 7
  %v165 = vadd.s32 %v164, 8
  %v166 = vadd.s32 %v164, 16
  %v167 = vadd.s32 %v164, 24
  %v168 = vadd.s32 %v164, 32
  %v169 = vadd.s32 %v164, 40
  %v170 = vadd.s32 %v164, 48
  %v171 = vadd.s32 %v164, 56
  %vm172 = vcmp.lt.s32.totalorder %v164, 0
  %v173 = vsub.s32 0, %v164
  %v174 = vsel %vm172, %v173, %v164
  %v175 = vshrl.u32 %v174, 2
  %v176 = vand.u32 %v174, 3
  %v177 = vsub.s32 0, %v176
  %v178 = vsel %vm172, %v177, %v176
  %vm179 = vcmp.lt.s32.totalorder %v165, 0
  %v180 = vsub.s32 0, %v165
  %v181 = vsel %vm179, %v180, %v165
  %v182 = vshrl.u32 %v181, 2
  %v183 = vand.u32 %v181, 3
  %v184 = vsub.s32 0, %v183
  %v185 = vsel %vm179, %v184, %v183
  %vm186 = vcmp.lt.s32.totalorder %v166, 0
  %v187 = vsub.s32 0, %v166
  %v188 = vsel %vm186, %v187, %v166
  %v189 = vshrl.u32 %v188, 2
  %v190 = vand.u32 %v188, 3
  %v191 = vsub.s32 0, %v190
  %v192 = vsel %vm186, %v191, %v190
  %vm193 = vcmp.lt.s32.totalorder %v167, 0
  %v194 = vsub.s32 0, %v167
  %v195 = vsel %vm193, %v194, %v167
  %v196 = vshrl.u32 %v195, 2
  %v197 = vand.u32 %v195, 3
  %v198 = vsub.s32 0, %v197
  %v199 = vsel %vm193, %v198, %v197
  %vm200 = vcmp.lt.s32.totalorder %v168, 0
  %v201 = vsub.s32 0, %v168
  %v202 = vsel %vm200, %v201, %v168
  %v203 = vshrl.u32 %v202, 2
  %v204 = vand.u32 %v202, 3
  %v205 = vsub.s32 0, %v204
  %v206 = vsel %vm200, %v205, %v204
  %vm207 = vcmp.lt.s32.totalorder %v169, 0
  %v208 = vsub.s32 0, %v169
  %v209 = vsel %vm207, %v208, %v169
  %v210 = vshrl.u32 %v209, 2
  %v211 = vand.u32 %v209, 3
  %v212 = vsub.s32 0, %v211
  %v213 = vsel %vm207, %v212, %v211
  %vm214 = vcmp.lt.s32.totalorder %v170, 0
  %v215 = vsub.s32 0, %v170
  %v216 = vsel %vm214, %v215, %v170
  %v217 = vshrl.u32 %v216, 2
  %v218 = vand.u32 %v216, 3
  %v219 = vsub.s32 0, %v218
  %v220 = vsel %vm214, %v219, %v218
  %vm221 = vcmp.lt.s32.totalorder %v171, 0
  %v222 = vsub.s32 0, %v171
  %v223 = vsel %vm221, %v222, %v171
  %v224 = vshrl.u32 %v223, 2
  %v225 = vand.u32 %v223, 3
  %v226 = vsub.s32 0, %v225
  %v227 = vsel %vm221, %v226, %v225
  %vm228 = vcmp.ne.s32.totalorder %v178, 0
  %vm229 = vcmp.ne.s32.totalorder %v185, 0
  %vm230 = vcmp.ne.s32.totalorder %v192, 0
  %vm231 = vcmp.ne.s32.totalorder %v199, 0
  %vm232 = vcmp.ne.s32.totalorder %v206, 0
  %vm233 = vcmp.ne.s32.totalorder %v213, 0
  %vm234 = vcmp.ne.s32.totalorder %v220, 0
  %vm235 = vcmp.ne.s32.totalorder %v227, 0
  %vm236 = vcmp.lt.s32.totalorder %v178, 0
  %vm237 = vcmp.lt.s32.totalorder %v185, 0
  %vm238 = vcmp.lt.s32.totalorder %v192, 0
  %vm239 = vcmp.lt.s32.totalorder %v199, 0
  %vm240 = vcmp.lt.s32.totalorder %v206, 0
  %vm241 = vcmp.lt.s32.totalorder %v213, 0
  %vm242 = vcmp.lt.s32.totalorder %v220, 0
  %vm243 = vcmp.lt.s32.totalorder %v227, 0
  %vm244 = vmand %vm236, %vm228
  %vm245 = vmand %vm237, %vm229
  %vm246 = vmand %vm238, %vm230
  %vm247 = vmand %vm239, %vm231
  %vm248 = vmand %vm240, %vm232
  %vm249 = vmand %vm241, %vm233
  %vm250 = vmand %vm242, %vm234
  %vm251 = vmand %vm243, %vm235
  %v252 = vadd.s32 %v178, 4
  %v253 = vadd.s32 %v185, 4
  %v254 = vadd.s32 %v192, 4
  %v255 = vadd.s32 %v199, 4
  %v256 = vadd.s32 %v206, 4
  %v257 = vadd.s32 %v213, 4
  %v258 = vadd.s32 %v220, 4
  %v259 = vadd.s32 %v227, 4
  %v260 = vsel %vm244, %v252, %v178
  %v261 = vsel %vm245, %v253, %v185
  %v262 = vsel %vm246, %v254, %v192
  %v263 = vsel %vm247, %v255, %v199
  %v264 = vsel %vm248, %v256, %v206
  %v265 = vsel %vm249, %v257, %v213
  %v266 = vsel %vm250, %v258, %v220
  %v267 = vsel %vm251, %v259, %v227
  %vm268 = vcmp.eq.s32.totalorder %v260, 0
  %vm269 = vcmp.eq.s32.totalorder %v261, 0
  %vm270 = vcmp.eq.s32.totalorder %v262, 0
  %vm271 = vcmp.eq.s32.totalorder %v263, 0
  %vm272 = vcmp.eq.s32.totalorder %v264, 0
  %vm273 = vcmp.eq.s32.totalorder %v265, 0
  %vm274 = vcmp.eq.s32.totalorder %v266, 0
  %vm275 = vcmp.eq.s32.totalorder %v267, 0
  %v276 = vsel %vm268, 1, 0
  %v277 = vsel %vm269, 1, 0
  %v278 = vsel %vm270, 1, 0
  %v279 = vsel %vm271, 1, 0
  %v280 = vsel %vm272, 1, 0
  %v281 = vsel %vm273, 1, 0
  %v282 = vsel %vm274, 1, 0
  %v283 = vsel %vm275, 1, 0
  %vm284 = vcmp.eq.s32.totalorder %v276, 1
  %vm285 = vcmp.eq.s32.totalorder %v277, 1
  %vm286 = vcmp.eq.s32.totalorder %v278, 1
  %vm287 = vcmp.eq.s32.totalorder %v279, 1
  %vm288 = vcmp.eq.s32.totalorder %v280, 1
  %vm289 = vcmp.eq.s32.totalorder %v281, 1
  %vm290 = vcmp.eq.s32.totalorder %v282, 1
  %vm291 = vcmp.eq.s32.totalorder %v283, 1
  %v292 = vsel %vm284, %v125, 0.0
  %v293 = vsel %vm285, %v130, 0.0
  %v294 = vsel %vm286, %v135, 0.0
  %v295 = vsel %vm287, %v140, 0.0
  %v296 = vsel %vm288, %v145, 0.0
  %v297 = vsel %vm289, %v150, 0.0
  %v298 = vsel %vm290, %v155, 0.0
  %v299 = vsel %vm291, %v160, 0.0
  %vm300 = vcmp.eq.s32.totalorder %v260, 1
  %vm301 = vcmp.eq.s32.totalorder %v261, 1
  %vm302 = vcmp.eq.s32.totalorder %v262, 1
  %vm303 = vcmp.eq.s32.totalorder %v263, 1
  %vm304 = vcmp.eq.s32.totalorder %v264, 1
  %vm305 = vcmp.eq.s32.totalorder %v265, 1
  %vm306 = vcmp.eq.s32.totalorder %v266, 1
  %vm307 = vcmp.eq.s32.totalorder %v267, 1
  %v308 = vsel %vm300, 1, 0
  %v309 = vsel %vm301, 1, 0
  %v310 = vsel %vm302, 1, 0
  %v311 = vsel %vm303, 1, 0
  %v312 = vsel %vm304, 1, 0
  %v313 = vsel %vm305, 1, 0
  %v314 = vsel %vm306, 1, 0
  %v315 = vsel %vm307, 1, 0
  %vm316 = vcmp.eq.s32.totalorder %v308, 1
  %vm317 = vcmp.eq.s32.totalorder %v309, 1
  %vm318 = vcmp.eq.s32.totalorder %v310, 1
  %vm319 = vcmp.eq.s32.totalorder %v311, 1
  %vm320 = vcmp.eq.s32.totalorder %v312, 1
  %vm321 = vcmp.eq.s32.totalorder %v313, 1
  %vm322 = vcmp.eq.s32.totalorder %v314, 1
  %vm323 = vcmp.eq.s32.totalorder %v315, 1
  %332 = vrot.lane.b32.xlu0 %v292, 8
  %v333 = vpop.permute.xlu0 %332
  %334 = vrot.lane.b32.xlu0 %v293, 8
  %v335 = vpop.permute.xlu0 %334
  %336 = vrot.lane.b32.xlu0 %v294, 8
  %v337 = vpop.permute.xlu0 %336
  %338 = vrot.lane.b32.xlu0 %v295, 8
  %v339 = vpop.permute.xlu0 %338
  %340 = vrot.lane.b32.xlu0 %v296, 8
  %v341 = vpop.permute.xlu0 %340
  %342 = vrot.lane.b32.xlu0 %v297, 8
  %v343 = vpop.permute.xlu0 %342
  %344 = vrot.lane.b32.xlu0 %v298, 8
  %v345 = vpop.permute.xlu0 %344
  %346 = vrot.lane.b32.xlu0 %v299, 8
  %v347 = vpop.permute.xlu0 %346
  %v356 = vsel %vm316, %v125, %v333
  %v357 = vsel %vm317, %v130, %v335
  %v358 = vsel %vm318, %v135, %v337
  %v359 = vsel %vm319, %v140, %v339
  %v360 = vsel %vm320, %v145, %v341
  %v361 = vsel %vm321, %v150, %v343
  %v362 = vsel %vm322, %v155, %v345
  %v363 = vsel %vm323, %v160, %v347
  %vm364 = vcmp.eq.s32.totalorder %v260, 2
  %vm365 = vcmp.eq.s32.totalorder %v261, 2
  %vm366 = vcmp.eq.s32.totalorder %v262, 2
  %vm367 = vcmp.eq.s32.totalorder %v263, 2
  %vm368 = vcmp.eq.s32.totalorder %v264, 2
  %vm369 = vcmp.eq.s32.totalorder %v265, 2
  %vm370 = vcmp.eq.s32.totalorder %v266, 2
  %vm371 = vcmp.eq.s32.totalorder %v267, 2
  %v372 = vsel %vm364, 1, 0
  %v373 = vsel %vm365, 1, 0
  %v374 = vsel %vm366, 1, 0
  %v375 = vsel %vm367, 1, 0
  %v376 = vsel %vm368, 1, 0
  %v377 = vsel %vm369, 1, 0
  %v378 = vsel %vm370, 1, 0
  %v379 = vsel %vm371, 1, 0
  %vm380 = vcmp.eq.s32.totalorder %v372, 1
  %vm381 = vcmp.eq.s32.totalorder %v373, 1
  %vm382 = vcmp.eq.s32.totalorder %v374, 1
  %vm383 = vcmp.eq.s32.totalorder %v375, 1
  %vm384 = vcmp.eq.s32.totalorder %v376, 1
  %vm385 = vcmp.eq.s32.totalorder %v377, 1
  %vm386 = vcmp.eq.s32.totalorder %v378, 1
  %vm387 = vcmp.eq.s32.totalorder %v379, 1
  %396 = vrot.lane.b32.xlu0 %v356, 8
  %v397 = vpop.permute.xlu0 %396
  %398 = vrot.lane.b32.xlu0 %v357, 8
  %v399 = vpop.permute.xlu0 %398
  %400 = vrot.lane.b32.xlu0 %v358, 8
  %v401 = vpop.permute.xlu0 %400
  %402 = vrot.lane.b32.xlu0 %v359, 8
  %v403 = vpop.permute.xlu0 %402
  %404 = vrot.lane.b32.xlu0 %v360, 8
  %v405 = vpop.permute.xlu0 %404
  %406 = vrot.lane.b32.xlu0 %v361, 8
  %v407 = vpop.permute.xlu0 %406
  %408 = vrot.lane.b32.xlu0 %v362, 8
  %v409 = vpop.permute.xlu0 %408
  %410 = vrot.lane.b32.xlu0 %v363, 8
  %v411 = vpop.permute.xlu0 %410
  %v420 = vsel %vm380, %v125, %v397
  %v421 = vsel %vm381, %v130, %v399
  %v422 = vsel %vm382, %v135, %v401
  %v423 = vsel %vm383, %v140, %v403
  %v424 = vsel %vm384, %v145, %v405
  %v425 = vsel %vm385, %v150, %v407
  %v426 = vsel %vm386, %v155, %v409
  %v427 = vsel %vm387, %v160, %v411
  %vm428 = vcmp.eq.s32.totalorder %v260, 3
  %vm429 = vcmp.eq.s32.totalorder %v261, 3
  %vm430 = vcmp.eq.s32.totalorder %v262, 3
  %vm431 = vcmp.eq.s32.totalorder %v263, 3
  %vm432 = vcmp.eq.s32.totalorder %v264, 3
  %vm433 = vcmp.eq.s32.totalorder %v265, 3
  %vm434 = vcmp.eq.s32.totalorder %v266, 3
  %vm435 = vcmp.eq.s32.totalorder %v267, 3
  %v436 = vsel %vm428, 1, 0
  %v437 = vsel %vm429, 1, 0
  %v438 = vsel %vm430, 1, 0
  %v439 = vsel %vm431, 1, 0
  %v440 = vsel %vm432, 1, 0
  %v441 = vsel %vm433, 1, 0
  %v442 = vsel %vm434, 1, 0
  %v443 = vsel %vm435, 1, 0
  %vm444 = vcmp.eq.s32.totalorder %v436, 1
  %vm445 = vcmp.eq.s32.totalorder %v437, 1
  %vm446 = vcmp.eq.s32.totalorder %v438, 1
  %vm447 = vcmp.eq.s32.totalorder %v439, 1
  %vm448 = vcmp.eq.s32.totalorder %v440, 1
  %vm449 = vcmp.eq.s32.totalorder %v441, 1
  %vm450 = vcmp.eq.s32.totalorder %v442, 1
  %vm451 = vcmp.eq.s32.totalorder %v443, 1
  %460 = vrot.lane.b32.xlu0 %v420, 8
  %v461 = vpop.permute.xlu0 %460
  %462 = vrot.lane.b32.xlu0 %v421, 8
  %v463 = vpop.permute.xlu0 %462
  %464 = vrot.lane.b32.xlu0 %v422, 8
  %v465 = vpop.permute.xlu0 %464
  %466 = vrot.lane.b32.xlu0 %v423, 8
  %v467 = vpop.permute.xlu0 %466
  %468 = vrot.lane.b32.xlu0 %v424, 8
  %v469 = vpop.permute.xlu0 %468
  %470 = vrot.lane.b32.xlu0 %v425, 8
  %v471 = vpop.permute.xlu0 %470
  %472 = vrot.lane.b32.xlu0 %v426, 8
  %v473 = vpop.permute.xlu0 %472
  %474 = vrot.lane.b32.xlu0 %v427, 8
  %v475 = vpop.permute.xlu0 %474
  %v484 = vsel %vm444, %v125, %v461
  %v485 = vsel %vm445, %v130, %v463
  %v486 = vsel %vm446, %v135, %v465
  %v487 = vsel %vm447, %v140, %v467
  %v488 = vsel %vm448, %v145, %v469
  %v489 = vsel %vm449, %v150, %v471
  %v490 = vsel %vm450, %v155, %v473
  %v491 = vsel %vm451, %v160, %v475
  %493 = vrot.lane.b32.xlu0 %v484, 104
  %v494 = vpop.permute.xlu0 %493
  %495 = vrot.lane.b32.xlu0 %v484, 72
  %v496 = vpop.permute.xlu0 %495
  %vm497 = vcmask 64512
  %v498 = vsel %vm497, %v494, 0
  %v500 = vsel %vm497, %v496, 0
  %502 = vmatprep.subr.mxu0 0.0
  %503 = vmatpush1.xpose.msra.mxu0 %v500
  %504 = vmatprep.subr.mxu0 0.0
  %505 = vmatpush1.xpose.msra.mxu0 0.0
  %506 = vmatprep.subr.mxu0 0.0
  %507 = vmatpush1.xpose.msra.mxu0 0.0
  %508 = vmatprep.subr.mxu0 0.0
  %509 = vmatpush1.xpose.msra.mxu0 0.0
  %510 = vmatprep.subr.mxu0 0.0
  %511 = vmatpush1.xpose.msra.mxu0 0.0
  %512 = vmatprep.subr.mxu0 0.0
  %513 = vmatpush1.xpose.msra.mxu0 0.0
  %514 = vmatprep.subr.mxu0 0.0
  %515 = vmatpush1.xpose.msra.mxu0 0.0
  %516 = vmatprep.subr.mxu0 0.0
  %517 = vmatpush1.xpose.msra.mxu0 0.0
  %518 = vmatprep.subr.mxu0 0.0
  %519 = vmatpush1.xpose.msra.mxu0 0.0
  %520 = vmatprep.subr.mxu0 0.0
  %521 = vmatpush1.xpose.msra.mxu0 0.0
  %522 = vmatprep.subr.mxu0 0.0
  %523 = vmatpush1.xpose.msra.mxu0 0.0
  %524 = vmatprep.subr.mxu0 0.0
  %525 = vmatpush1.xpose.msra.mxu0 0.0
  %526 = vmatprep.subr.mxu0 0.0
  %527 = vmatpush1.xpose.msra.mxu0 0.0
  %528 = vmatprep.subr.mxu0 0.0
  %529 = vmatpush1.xpose.msra.mxu0 0.0
  %530 = vmatprep.subr.mxu0 0.0
  %531 = vmatpush1.xpose.msra.mxu0 0.0
  %532 = vmatprep.subr.mxu0 0.0
  %533 = vmatpush1.xpose.msra.mxu0 0.0
  %534 = vmatprep.subr.mxu0 0.0
  %535 = vmatpush1.xpose.msra.mxu0 0.0
  %536 = vmatprep.subr.mxu0 0.0
  %537 = vmatpush1.xpose.msra.mxu0 0.0
  %538 = vmatprep.subr.mxu0 0.0
  %539 = vmatpush1.xpose.msra.mxu0 0.0
  %540 = vmatprep.subr.mxu0 0.0
  %541 = vmatpush1.xpose.msra.mxu0 0.0
  %542 = vmatprep.subr.mxu0 0.0
  %543 = vmatpush1.xpose.msra.mxu0 0.0
  %544 = vmatprep.subr.mxu0 0.0
  %545 = vmatpush1.xpose.msra.mxu0 0.0
  %546 = vmatprep.subr.mxu0 0.0
  %547 = vmatpush1.xpose.msra.mxu0 0.0
  %548 = vmatprep.subr.mxu0 0.0
  %549 = vmatpush1.xpose.msra.mxu0 0.0
  %550 = vmatprep.subr.mxu0 0.0
  %551 = vmatpush1.xpose.msra.mxu0 0.0
  %552 = vmatprep.subr.mxu0 0.0
  %553 = vmatpush1.xpose.msra.mxu0 0.0
  %554 = vmatprep.subr.mxu0 0.0
  %555 = vmatpush1.xpose.msra.mxu0 0.0
  %556 = vmatprep.subr.mxu0 0.0
  %557 = vmatpush1.xpose.msra.mxu0 0.0
  %558 = vmatprep.subr.mxu0 0.0
  %559 = vmatpush1.xpose.msra.mxu0 0.0
  %560 = vmatprep.subr.mxu0 0.0
  %561 = vmatpush1.xpose.msra.mxu0 0.0
  %562 = vmatprep.subr.mxu0 0.0
  %563 = vmatpush1.xpose.msra.mxu0 0.0
  %564 = vmatprep.subr.mxu0 0.0
  %565 = vmatpush1.xpose.msra.mxu0 0.0
  %566 = vmatprep.mubr.f32.mxu0 0.0
  %567 = vmatmul.mubr.f32.gmra.mrb[0].mxu0 %v498
  %v568 = vpop.f32.mrb[0].mxu0
  %v569 = vadd.f32 0.0, %v568
  %v570 = vpop.f32.mrb[0].mxu0
  %571 = vdwg.mxu0
  %v572 = vmul.f32 %v569, 0.17677669
  %v573 = vsel %vm497, %v572, -inf
  %574 = vmax.xlane.f32.xlu0 %v573
  %v575 = vpop.xlane.xlu0 %574
  %v576 = vsub.f32 %v572, %v575
  %v577 = vmul.f32 %v576, 1.442695
  %v578 = vpow.pop %v577
  %v579 = vsel %vm497, %v578, 0.0
  %580 = vadd.xlane.f32.xlu0 %v579
  %v581 = vpop.xlane.xlu0 %580
  %v582 = vrcp.pop %v581
  %v583 = vmul.f32 %v578, %v582
  %584 = vrot.lane.b32.xlu0 %v484, 40
  %v585 = vpop.permute.xlu0 %584
  %v588 = vsel %vm497, %v583, 0
  %590 = vmatprep.subr.mxu0 0.0
  %591 = vmatpush1.msra.mxu0 %v585
  %592 = vmatprep.subr.mxu0 0.0
  %593 = vmatpush1.msra.mxu0 0.0
  %594 = vmatprep.subr.mxu0 0.0
  %595 = vmatpush1.msra.mxu0 0.0
  %596 = vmatprep.subr.mxu0 0.0
  %597 = vmatpush1.msra.mxu0 0.0
  %598 = vmatprep.subr.mxu0 0.0
  %599 = vmatpush1.msra.mxu0 0.0
  %600 = vmatprep.subr.mxu0 0.0
  %601 = vmatpush1.msra.mxu0 0.0
  %602 = vmatprep.subr.mxu0 0.0
  %603 = vmatpush1.msra.mxu0 0.0
  %604 = vmatprep.subr.mxu0 0.0
  %605 = vmatpush1.msra.mxu0 0.0
  %606 = vmatprep.subr.mxu0 0.0
  %607 = vmatpush1.msra.mxu0 0.0
  %608 = vmatprep.subr.mxu0 0.0
  %609 = vmatpush1.msra.mxu0 0.0
  %610 = vmatprep.subr.mxu0 0.0
  %611 = vmatpush1.msra.mxu0 0.0
  %612 = vmatprep.subr.mxu0 0.0
  %613 = vmatpush1.msra.mxu0 0.0
  %614 = vmatprep.subr.mxu0 0.0
  %615 = vmatpush1.msra.mxu0 0.0
  %616 = vmatprep.subr.mxu0 0.0
  %617 = vmatpush1.msra.mxu0 0.0
  %618 = vmatprep.subr.mxu0 0.0
  %619 = vmatpush1.msra.mxu0 0.0
  %620 = vmatprep.subr.mxu0 0.0
  %621 = vmatpush1.msra.mxu0 0.0
  %622 = vmatprep.subr.mxu0 0.0
  %623 = vmatpush1.msra.mxu0 0.0
  %624 = vmatprep.subr.mxu0 0.0
  %625 = vmatpush1.msra.mxu0 0.0
  %626 = vmatprep.subr.mxu0 0.0
  %627 = vmatpush1.msra.mxu0 0.0
  %628 = vmatprep.subr.mxu0 0.0
  %629 = vmatpush1.msra.mxu0 0.0
  %630 = vmatprep.subr.mxu0 0.0
  %631 = vmatpush1.msra.mxu0 0.0
  %632 = vmatprep.subr.mxu0 0.0
  %633 = vmatpush1.msra.mxu0 0.0
  %634 = vmatprep.subr.mxu0 0.0
  %635 = vmatpush1.msra.mxu0 0.0
  %636 = vmatprep.subr.mxu0 0.0
  %637 = vmatpush1.msra.mxu0 0.0
  %638 = vmatprep.subr.mxu0 0.0
  %639 = vmatpush1.msra.mxu0 0.0
  %640 = vmatprep.subr.mxu0 0.0
  %641 = vmatpush1.msra.mxu0 0.0
  %642 = vmatprep.subr.mxu0 0.0
  %643 = vmatpush1.msra.mxu0 0.0
  %644 = vmatprep.subr.mxu0 0.0
  %645 = vmatpush1.msra.mxu0 0.0
  %646 = vmatprep.subr.mxu0 0.0
  %647 = vmatpush1.msra.mxu0 0.0
  %648 = vmatprep.subr.mxu0 0.0
  %649 = vmatpush1.msra.mxu0 0.0
  %650 = vmatprep.subr.mxu0 0.0
  %651 = vmatpush1.msra.mxu0 0.0
  %652 = vmatprep.subr.mxu0 0.0
  %653 = vmatpush1.msra.mxu0 0.0
  %654 = vmatprep.mubr.f32.mxu0 0.0
  %655 = vmatmul.mubr.f32.gmra.mrb[0].mxu0 %v588
  %v656 = vpop.f32.mrb[0].mxu0
  %v657 = vadd.f32 0.0, %v656
  %v658 = vpop.f32.mrb[0].mxu0
  %659 = vdwg.mxu0
  %660 = vst.msk [vmem:[%s3] sm:$0xff] %vm497, %v657
  %662 = vrot.lane.b32.xlu0 %v485, 104
  %v663 = vpop.permute.xlu0 %662
  %664 = vrot.lane.b32.xlu0 %v485, 72
  %v665 = vpop.permute.xlu0 %664
  %v666 = vsel %vm497, %v663, 0
  %v668 = vsel %vm497, %v665, 0
  %670 = vmatprep.subr.mxu0 0.0
  %671 = vmatpush1.xpose.msra.mxu0 %v668
  %672 = vmatprep.subr.mxu0 0.0
  %673 = vmatpush1.xpose.msra.mxu0 0.0
  %674 = vmatprep.subr.mxu0 0.0
  %675 = vmatpush1.xpose.msra.mxu0 0.0
  %676 = vmatprep.subr.mxu0 0.0
  %677 = vmatpush1.xpose.msra.mxu0 0.0
  %678 = vmatprep.subr.mxu0 0.0
  %679 = vmatpush1.xpose.msra.mxu0 0.0
  %680 = vmatprep.subr.mxu0 0.0
  %681 = vmatpush1.xpose.msra.mxu0 0.0
  %682 = vmatprep.subr.mxu0 0.0
  %683 = vmatpush1.xpose.msra.mxu0 0.0
  %684 = vmatprep.subr.mxu0 0.0
  %685 = vmatpush1.xpose.msra.mxu0 0.0
  %686 = vmatprep.subr.mxu0 0.0
  %687 = vmatpush1.xpose.msra.mxu0 0.0
  %688 = vmatprep.subr.mxu0 0.0
  %689 = vmatpush1.xpose.msra.mxu0 0.0
  %690 = vmatprep.subr.mxu0 0.0
  %691 = vmatpush1.xpose.msra.mxu0 0.0
  %692 = vmatprep.subr.mxu0 0.0
  %693 = vmatpush1.xpose.msra.mxu0 0.0
  %694 = vmatprep.subr.mxu0 0.0
  %695 = vmatpush1.xpose.msra.mxu0 0.0
  %696 = vmatprep.subr.mxu0 0.0
  %697 = vmatpush1.xpose.msra.mxu0 0.0
  %698 = vmatprep.subr.mxu0 0.0
  %699 = vmatpush1.xpose.msra.mxu0 0.0
  %700 = vmatprep.subr.mxu0 0.0
  %701 = vmatpush1.xpose.msra.mxu0 0.0
  %702 = vmatprep.subr.mxu0 0.0
  %703 = vmatpush1.xpose.msra.mxu0 0.0
  %704 = vmatprep.subr.mxu0 0.0
  %705 = vmatpush1.xpose.msra.mxu0 0.0
  %706 = vmatprep.subr.mxu0 0.0
  %707 = vmatpush1.xpose.msra.mxu0 0.0
  %708 = vmatprep.subr.mxu0 0.0
  %709 = vmatpush1.xpose.msra.mxu0 0.0
  %710 = vmatprep.subr.mxu0 0.0
  %711 = vmatpush1.xpose.msra.mxu0 0.0
  %712 = vmatprep.subr.mxu0 0.0
  %713 = vmatpush1.xpose.msra.mxu0 0.0
  %714 = vmatprep.subr.mxu0 0.0
  %715 = vmatpush1.xpose.msra.mxu0 0.0
  %716 = vmatprep.subr.mxu0 0.0
  %717 = vmatpush1.xpose.msra.mxu0 0.0
  %718 = vmatprep.subr.mxu0 0.0
  %719 = vmatpush1.xpose.msra.mxu0 0.0
  %720 = vmatprep.subr.mxu0 0.0
  %721 = vmatpush1.xpose.msra.mxu0 0.0
  %722 = vmatprep.subr.mxu0 0.0
  %723 = vmatpush1.xpose.msra.mxu0 0.0
  %724 = vmatprep.subr.mxu0 0.0
  %725 = vmatpush1.xpose.msra.mxu0 0.0
  %726 = vmatprep.subr.mxu0 0.0
  %727 = vmatpush1.xpose.msra.mxu0 0.0
  %728 = vmatprep.subr.mxu0 0.0
  %729 = vmatpush1.xpose.msra.mxu0 0.0
  %730 = vmatprep.subr.mxu0 0.0
  %731 = vmatpush1.xpose.msra.mxu0 0.0
  %732 = vmatprep.subr.mxu0 0.0
  %733 = vmatpush1.xpose.msra.mxu0 0.0
  %734 = vmatprep.mubr.f32.mxu0 0.0
  %735 = vmatmul.mubr.f32.gmra.mrb[0].mxu0 %v666
  %v736 = vpop.f32.mrb[0].mxu0
  %v737 = vadd.f32 0.0, %v736
  %v738 = vpop.f32.mrb[0].mxu0
  %739 = vdwg.mxu0
  %v740 = vmul.f32 %v737, 0.17677669
  %v741 = vsel %vm497, %v740, -inf
  %742 = vmax.xlane.f32.xlu0 %v741
  %v743 = vpop.xlane.xlu0 %742
  %v744 = vsub.f32 %v740, %v743
  %v745 = vmul.f32 %v744, 1.442695
  %v746 = vpow.pop %v745
  %v747 = vsel %vm497, %v746, 0.0
  %748 = vadd.xlane.f32.xlu0 %v747
  %v749 = vpop.xlane.xlu0 %748
  %v750 = vrcp.pop %v749
  %v751 = vmul.f32 %v746, %v750
  %752 = vrot.lane.b32.xlu0 %v485, 40
  %v753 = vpop.permute.xlu0 %752
  %v756 = vsel %vm497, %v751, 0
  %758 = vmatprep.subr.mxu0 0.0
  %759 = vmatpush1.msra.mxu0 %v753
  %760 = vmatprep.subr.mxu0 0.0
  %761 = vmatpush1.msra.mxu0 0.0
  %762 = vmatprep.subr.mxu0 0.0
  %763 = vmatpush1.msra.mxu0 0.0
  %764 = vmatprep.subr.mxu0 0.0
  %765 = vmatpush1.msra.mxu0 0.0
  %766 = vmatprep.subr.mxu0 0.0
  %767 = vmatpush1.msra.mxu0 0.0
  %768 = vmatprep.subr.mxu0 0.0
  %769 = vmatpush1.msra.mxu0 0.0
  %770 = vmatprep.subr.mxu0 0.0
  %771 = vmatpush1.msra.mxu0 0.0
  %772 = vmatprep.subr.mxu0 0.0
  %773 = vmatpush1.msra.mxu0 0.0
  %774 = vmatprep.subr.mxu0 0.0
  %775 = vmatpush1.msra.mxu0 0.0
  %776 = vmatprep.subr.mxu0 0.0
  %777 = vmatpush1.msra.mxu0 0.0
  %778 = vmatprep.subr.mxu0 0.0
  %779 = vmatpush1.msra.mxu0 0.0
  %780 = vmatprep.subr.mxu0 0.0
  %781 = vmatpush1.msra.mxu0 0.0
  %782 = vmatprep.subr.mxu0 0.0
  %783 = vmatpush1.msra.mxu0 0.0
  %784 = vmatprep.subr.mxu0 0.0
  %785 = vmatpush1.msra.mxu0 0.0
  %786 = vmatprep.subr.mxu0 0.0
  %787 = vmatpush1.msra.mxu0 0.0
  %788 = vmatprep.subr.mxu0 0.0
  %789 = vmatpush1.msra.mxu0 0.0
  %790 = vmatprep.subr.mxu0 0.0
  %791 = vmatpush1.msra.mxu0 0.0
  %792 = vmatprep.subr.mxu0 0.0
  %793 = vmatpush1.msra.mxu0 0.0
  %794 = vmatprep.subr.mxu0 0.0
  %795 = vmatpush1.msra.mxu0 0.0
  %796 = vmatprep.subr.mxu0 0.0
  %797 = vmatpush1.msra.mxu0 0.0
  %798 = vmatprep.subr.mxu0 0.0
  %799 = vmatpush1.msra.mxu0 0.0
  %800 = vmatprep.subr.mxu0 0.0
  %801 = vmatpush1.msra.mxu0 0.0
  %802 = vmatprep.subr.mxu0 0.0
  %803 = vmatpush1.msra.mxu0 0.0
  %804 = vmatprep.subr.mxu0 0.0
  %805 = vmatpush1.msra.mxu0 0.0
  %806 = vmatprep.subr.mxu0 0.0
  %807 = vmatpush1.msra.mxu0 0.0
  %808 = vmatprep.subr.mxu0 0.0
  %809 = vmatpush1.msra.mxu0 0.0
  %810 = vmatprep.subr.mxu0 0.0
  %811 = vmatpush1.msra.mxu0 0.0
  %812 = vmatprep.subr.mxu0 0.0
  %813 = vmatpush1.msra.mxu0 0.0
  %814 = vmatprep.subr.mxu0 0.0
  %815 = vmatpush1.msra.mxu0 0.0
  %816 = vmatprep.subr.mxu0 0.0
  %817 = vmatpush1.msra.mxu0 0.0
  %818 = vmatprep.subr.mxu0 0.0
  %819 = vmatpush1.msra.mxu0 0.0
  %820 = vmatprep.subr.mxu0 0.0
  %821 = vmatpush1.msra.mxu0 0.0
  %822 = vmatprep.mubr.f32.mxu0 0.0
  %823 = vmatmul.mubr.f32.gmra.mrb[0].mxu0 %v756
  %v824 = vpop.f32.mrb[0].mxu0
  %v825 = vadd.f32 0.0, %v824
  %v826 = vpop.f32.mrb[0].mxu0
  %827 = vdwg.mxu0
  %828 = vst.msk [vmem:[%s3 + $0x8] sm:$0xff] %vm497, %v825
  %830 = vrot.lane.b32.xlu0 %v486, 104
  %v831 = vpop.permute.xlu0 %830
  %832 = vrot.lane.b32.xlu0 %v486, 72
  %v833 = vpop.permute.xlu0 %832
  %v834 = vsel %vm497, %v831, 0
  %v836 = vsel %vm497, %v833, 0
  %838 = vmatprep.subr.mxu0 0.0
  %839 = vmatpush1.xpose.msra.mxu0 %v836
  %840 = vmatprep.subr.mxu0 0.0
  %841 = vmatpush1.xpose.msra.mxu0 0.0
  %842 = vmatprep.subr.mxu0 0.0
  %843 = vmatpush1.xpose.msra.mxu0 0.0
  %844 = vmatprep.subr.mxu0 0.0
  %845 = vmatpush1.xpose.msra.mxu0 0.0
  %846 = vmatprep.subr.mxu0 0.0
  %847 = vmatpush1.xpose.msra.mxu0 0.0
  %848 = vmatprep.subr.mxu0 0.0
  %849 = vmatpush1.xpose.msra.mxu0 0.0
  %850 = vmatprep.subr.mxu0 0.0
  %851 = vmatpush1.xpose.msra.mxu0 0.0
  %852 = vmatprep.subr.mxu0 0.0
  %853 = vmatpush1.xpose.msra.mxu0 0.0
  %854 = vmatprep.subr.mxu0 0.0
  %855 = vmatpush1.xpose.msra.mxu0 0.0
  %856 = vmatprep.subr.mxu0 0.0
  %857 = vmatpush1.xpose.msra.mxu0 0.0
  %858 = vmatprep.subr.mxu0 0.0
  %859 = vmatpush1.xpose.msra.mxu0 0.0
  %860 = vmatprep.subr.mxu0 0.0
  %861 = vmatpush1.xpose.msra.mxu0 0.0
  %862 = vmatprep.subr.mxu0 0.0
  %863 = vmatpush1.xpose.msra.mxu0 0.0
  %864 = vmatprep.subr.mxu0 0.0
  %865 = vmatpush1.xpose.msra.mxu0 0.0
  %866 = vmatprep.subr.mxu0 0.0
  %867 = vmatpush1.xpose.msra.mxu0 0.0
  %868 = vmatprep.subr.mxu0 0.0
  %869 = vmatpush1.xpose.msra.mxu0 0.0
  %870 = vmatprep.subr.mxu0 0.0
  %871 = vmatpush1.xpose.msra.mxu0 0.0
  %872 = vmatprep.subr.mxu0 0.0
  %873 = vmatpush1.xpose.msra.mxu0 0.0
  %874 = vmatprep.subr.mxu0 0.0
  %875 = vmatpush1.xpose.msra.mxu0 0.0
  %876 = vmatprep.subr.mxu0 0.0
  %877 = vmatpush1.xpose.msra.mxu0 0.0
  %878 = vmatprep.subr.mxu0 0.0
  %879 = vmatpush1.xpose.msra.mxu0 0.0
  %880 = vmatprep.subr.mxu0 0.0
  %881 = vmatpush1.xpose.msra.mxu0 0.0
  %882 = vmatprep.subr.mxu0 0.0
  %883 = vmatpush1.xpose.msra.mxu0 0.0
  %884 = vmatprep.subr.mxu0 0.0
  %885 = vmatpush1.xpose.msra.mxu0 0.0
  %886 = vmatprep.subr.mxu0 0.0
  %887 = vmatpush1.xpose.msra.mxu0 0.0
  %888 = vmatprep.subr.mxu0 0.0
  %889 = vmatpush1.xpose.msra.mxu0 0.0
  %890 = vmatprep.subr.mxu0 0.0
  %891 = vmatpush1.xpose.msra.mxu0 0.0
  %892 = vmatprep.subr.mxu0 0.0
  %893 = vmatpush1.xpose.msra.mxu0 0.0
  %894 = vmatprep.subr.mxu0 0.0
  %895 = vmatpush1.xpose.msra.mxu0 0.0
  %896 = vmatprep.subr.mxu0 0.0
  %897 = vmatpush1.xpose.msra.mxu0 0.0
  %898 = vmatprep.subr.mxu0 0.0
  %899 = vmatpush1.xpose.msra.mxu0 0.0
  %900 = vmatprep.subr.mxu0 0.0
  %901 = vmatpush1.xpose.msra.mxu0 0.0
  %902 = vmatprep.mubr.f32.mxu0 0.0
  %903 = vmatmul.mubr.f32.gmra.mrb[0].mxu0 %v834
  %v904 = vpop.f32.mrb[0].mxu0
  %v905 = vadd.f32 0.0, %v904
  %v906 = vpop.f32.mrb[0].mxu0
  %907 = vdwg.mxu0
  %v908 = vmul.f32 %v905, 0.17677669
  %v909 = vsel %vm497, %v908, -inf
  %910 = vmax.xlane.f32.xlu0 %v909
  %v911 = vpop.xlane.xlu0 %910
  %v912 = vsub.f32 %v908, %v911
  %v913 = vmul.f32 %v912, 1.442695
  %v914 = vpow.pop %v913
  %v915 = vsel %vm497, %v914, 0.0
  %916 = vadd.xlane.f32.xlu0 %v915
  %v917 = vpop.xlane.xlu0 %916
  %v918 = vrcp.pop %v917
  %v919 = vmul.f32 %v914, %v918
  %920 = vrot.lane.b32.xlu0 %v486, 40
  %v921 = vpop.permute.xlu0 %920
  %v924 = vsel %vm497, %v919, 0
  %926 = vmatprep.subr.mxu0 0.0
  %927 = vmatpush1.msra.mxu0 %v921
  %928 = vmatprep.subr.mxu0 0.0
  %929 = vmatpush1.msra.mxu0 0.0
  %930 = vmatprep.subr.mxu0 0.0
  %931 = vmatpush1.msra.mxu0 0.0
  %932 = vmatprep.subr.mxu0 0.0
  %933 = vmatpush1.msra.mxu0 0.0
  %934 = vmatprep.subr.mxu0 0.0
  %935 = vmatpush1.msra.mxu0 0.0
  %936 = vmatprep.subr.mxu0 0.0
  %937 = vmatpush1.msra.mxu0 0.0
  %938 = vmatprep.subr.mxu0 0.0
  %939 = vmatpush1.msra.mxu0 0.0
  %940 = vmatprep.subr.mxu0 0.0
  %941 = vmatpush1.msra.mxu0 0.0
  %942 = vmatprep.subr.mxu0 0.0
  %943 = vmatpush1.msra.mxu0 0.0
  %944 = vmatprep.subr.mxu0 0.0
  %945 = vmatpush1.msra.mxu0 0.0
  %946 = vmatprep.subr.mxu0 0.0
  %947 = vmatpush1.msra.mxu0 0.0
  %948 = vmatprep.subr.mxu0 0.0
  %949 = vmatpush1.msra.mxu0 0.0
  %950 = vmatprep.subr.mxu0 0.0
  %951 = vmatpush1.msra.mxu0 0.0
  %952 = vmatprep.subr.mxu0 0.0
  %953 = vmatpush1.msra.mxu0 0.0
  %954 = vmatprep.subr.mxu0 0.0
  %955 = vmatpush1.msra.mxu0 0.0
  %956 = vmatprep.subr.mxu0 0.0
  %957 = vmatpush1.msra.mxu0 0.0
  %958 = vmatprep.subr.mxu0 0.0
  %959 = vmatpush1.msra.mxu0 0.0
  %960 = vmatprep.subr.mxu0 0.0
  %961 = vmatpush1.msra.mxu0 0.0
  %962 = vmatprep.subr.mxu0 0.0
  %963 = vmatpush1.msra.mxu0 0.0
  %964 = vmatprep.subr.mxu0 0.0
  %965 = vmatpush1.msra.mxu0 0.0
  %966 = vmatprep.subr.mxu0 0.0
  %967 = vmatpush1.msra.mxu0 0.0
  %968 = vmatprep.subr.mxu0 0.0
  %969 = vmatpush1.msra.mxu0 0.0
  %970 = vmatprep.subr.mxu0 0.0
  %971 = vmatpush1.msra.mxu0 0.0
  %972 = vmatprep.subr.mxu0 0.0
  %973 = vmatpush1.msra.mxu0 0.0
  %974 = vmatprep.subr.mxu0 0.0
  %975 = vmatpush1.msra.mxu0 0.0
  %976 = vmatprep.subr.mxu0 0.0
  %977 = vmatpush1.msra.mxu0 0.0
  %978 = vmatprep.subr.mxu0 0.0
  %979 = vmatpush1.msra.mxu0 0.0
  %980 = vmatprep.subr.mxu0 0.0
  %981 = vmatpush1.msra.mxu0 0.0
  %982 = vmatprep.subr.mxu0 0.0
  %983 = vmatpush1.msra.mxu0 0.0
  %984 = vmatprep.subr.mxu0 0.0
  %985 = vmatpush1.msra.mxu0 0.0
  %986 = vmatprep.subr.mxu0 0.0
  %987 = vmatpush1.msra.mxu0 0.0
  %988 = vmatprep.subr.mxu0 0.0
  %989 = vmatpush1.msra.mxu0 0.0
  %990 = vmatprep.mubr.f32.mxu0 0.0
  %991 = vmatmul.mubr.f32.gmra.mrb[0].mxu0 %v924
  %v992 = vpop.f32.mrb[0].mxu0
  %v993 = vadd.f32 0.0, %v992
  %v994 = vpop.f32.mrb[0].mxu0
  %995 = vdwg.mxu0
  %996 = vst.msk [vmem:[%s3 + $0x10] sm:$0xff] %vm497, %v993
  %998 = vrot.lane.b32.xlu0 %v487, 104
  %v999 = vpop.permute.xlu0 %998
  %1000 = vrot.lane.b32.xlu0 %v487, 72
  %v1001 = vpop.permute.xlu0 %1000
  %v1002 = vsel %vm497, %v999, 0
  %v1004 = vsel %vm497, %v1001, 0
  %1006 = vmatprep.subr.mxu0 0.0
  %1007 = vmatpush1.xpose.msra.mxu0 %v1004
  %1008 = vmatprep.subr.mxu0 0.0
  %1009 = vmatpush1.xpose.msra.mxu0 0.0
  %1010 = vmatprep.subr.mxu0 0.0
  %1011 = vmatpush1.xpose.msra.mxu0 0.0
  %1012 = vmatprep.subr.mxu0 0.0
  %1013 = vmatpush1.xpose.msra.mxu0 0.0
  %1014 = vmatprep.subr.mxu0 0.0
  %1015 = vmatpush1.xpose.msra.mxu0 0.0
  %1016 = vmatprep.subr.mxu0 0.0
  %1017 = vmatpush1.xpose.msra.mxu0 0.0
  %1018 = vmatprep.subr.mxu0 0.0
  %1019 = vmatpush1.xpose.msra.mxu0 0.0
  %1020 = vmatprep.subr.mxu0 0.0
  %1021 = vmatpush1.xpose.msra.mxu0 0.0
  %1022 = vmatprep.subr.mxu0 0.0
  %1023 = vmatpush1.xpose.msra.mxu0 0.0
  %1024 = vmatprep.subr.mxu0 0.0
  %1025 = vmatpush1.xpose.msra.mxu0 0.0
  %1026 = vmatprep.subr.mxu0 0.0
  %1027 = vmatpush1.xpose.msra.mxu0 0.0
  %1028 = vmatprep.subr.mxu0 0.0
  %1029 = vmatpush1.xpose.msra.mxu0 0.0
  %1030 = vmatprep.subr.mxu0 0.0
  %1031 = vmatpush1.xpose.msra.mxu0 0.0
  %1032 = vmatprep.subr.mxu0 0.0
  %1033 = vmatpush1.xpose.msra.mxu0 0.0
  %1034 = vmatprep.subr.mxu0 0.0
  %1035 = vmatpush1.xpose.msra.mxu0 0.0
  %1036 = vmatprep.subr.mxu0 0.0
  %1037 = vmatpush1.xpose.msra.mxu0 0.0
  %1038 = vmatprep.subr.mxu0 0.0
  %1039 = vmatpush1.xpose.msra.mxu0 0.0
  %1040 = vmatprep.subr.mxu0 0.0
  %1041 = vmatpush1.xpose.msra.mxu0 0.0
  %1042 = vmatprep.subr.mxu0 0.0
  %1043 = vmatpush1.xpose.msra.mxu0 0.0
  %1044 = vmatprep.subr.mxu0 0.0
  %1045 = vmatpush1.xpose.msra.mxu0 0.0
  %1046 = vmatprep.subr.mxu0 0.0
  %1047 = vmatpush1.xpose.msra.mxu0 0.0
  %1048 = vmatprep.subr.mxu0 0.0
  %1049 = vmatpush1.xpose.msra.mxu0 0.0
  %1050 = vmatprep.subr.mxu0 0.0
  %1051 = vmatpush1.xpose.msra.mxu0 0.0
  %1052 = vmatprep.subr.mxu0 0.0
  %1053 = vmatpush1.xpose.msra.mxu0 0.0
  %1054 = vmatprep.subr.mxu0 0.0
  %1055 = vmatpush1.xpose.msra.mxu0 0.0
  %1056 = vmatprep.subr.mxu0 0.0
  %1057 = vmatpush1.xpose.msra.mxu0 0.0
  %1058 = vmatprep.subr.mxu0 0.0
  %1059 = vmatpush1.xpose.msra.mxu0 0.0
  %1060 = vmatprep.subr.mxu0 0.0
  %1061 = vmatpush1.xpose.msra.mxu0 0.0
  %1062 = vmatprep.subr.mxu0 0.0
  %1063 = vmatpush1.xpose.msra.mxu0 0.0
  %1064 = vmatprep.subr.mxu0 0.0
  %1065 = vmatpush1.xpose.msra.mxu0 0.0
  %1066 = vmatprep.subr.mxu0 0.0
  %1067 = vmatpush1.xpose.msra.mxu0 0.0
  %1068 = vmatprep.subr.mxu0 0.0
  %1069 = vmatpush1.xpose.msra.mxu0 0.0
  %1070 = vmatprep.mubr.f32.mxu0 0.0
  %1071 = vmatmul.mubr.f32.gmra.mrb[0].mxu0 %v1002
  %v1072 = vpop.f32.mrb[0].mxu0
  %v1073 = vadd.f32 0.0, %v1072
  %v1074 = vpop.f32.mrb[0].mxu0
  %1075 = vdwg.mxu0
  %v1076 = vmul.f32 %v1073, 0.17677669
  %v1077 = vsel %vm497, %v1076, -inf
  %1078 = vmax.xlane.f32.xlu0 %v1077
  %v1079 = vpop.xlane.xlu0 %1078
  %v1080 = vsub.f32 %v1076, %v1079
  %v1081 = vmul.f32 %v1080, 1.442695
  %v1082 = vpow.pop %v1081
  %v1083 = vsel %vm497, %v1082, 0.0
  %1084 = vadd.xlane.f32.xlu0 %v1083
  %v1085 = vpop.xlane.xlu0 %1084
  %v1086 = vrcp.pop %v1085
  %v1087 = vmul.f32 %v1082, %v1086
  %1088 = vrot.lane.b32.xlu0 %v487, 40
  %v1089 = vpop.permute.xlu0 %1088
  %v1092 = vsel %vm497, %v1087, 0
  %1094 = vmatprep.subr.mxu0 0.0
  %1095 = vmatpush1.msra.mxu0 %v1089
  %1096 = vmatprep.subr.mxu0 0.0
  %1097 = vmatpush1.msra.mxu0 0.0
  %1098 = vmatprep.subr.mxu0 0.0
  %1099 = vmatpush1.msra.mxu0 0.0
  %1100 = vmatprep.subr.mxu0 0.0
  %1101 = vmatpush1.msra.mxu0 0.0
  %1102 = vmatprep.subr.mxu0 0.0
  %1103 = vmatpush1.msra.mxu0 0.0
  %1104 = vmatprep.subr.mxu0 0.0
  %1105 = vmatpush1.msra.mxu0 0.0
  %1106 = vmatprep.subr.mxu0 0.0
  %1107 = vmatpush1.msra.mxu0 0.0
  %1108 = vmatprep.subr.mxu0 0.0
  %1109 = vmatpush1.msra.mxu0 0.0
  %1110 = vmatprep.subr.mxu0 0.0
  %1111 = vmatpush1.msra.mxu0 0.0
  %1112 = vmatprep.subr.mxu0 0.0
  %1113 = vmatpush1.msra.mxu0 0.0
  %1114 = vmatprep.subr.mxu0 0.0
  %1115 = vmatpush1.msra.mxu0 0.0
  %1116 = vmatprep.subr.mxu0 0.0
  %1117 = vmatpush1.msra.mxu0 0.0
  %1118 = vmatprep.subr.mxu0 0.0
  %1119 = vmatpush1.msra.mxu0 0.0
  %1120 = vmatprep.subr.mxu0 0.0
  %1121 = vmatpush1.msra.mxu0 0.0
  %1122 = vmatprep.subr.mxu0 0.0
  %1123 = vmatpush1.msra.mxu0 0.0
  %1124 = vmatprep.subr.mxu0 0.0
  %1125 = vmatpush1.msra.mxu0 0.0
  %1126 = vmatprep.subr.mxu0 0.0
  %1127 = vmatpush1.msra.mxu0 0.0
  %1128 = vmatprep.subr.mxu0 0.0
  %1129 = vmatpush1.msra.mxu0 0.0
  %1130 = vmatprep.subr.mxu0 0.0
  %1131 = vmatpush1.msra.mxu0 0.0
  %1132 = vmatprep.subr.mxu0 0.0
  %1133 = vmatpush1.msra.mxu0 0.0
  %1134 = vmatprep.subr.mxu0 0.0
  %1135 = vmatpush1.msra.mxu0 0.0
  %1136 = vmatprep.subr.mxu0 0.0
  %1137 = vmatpush1.msra.mxu0 0.0
  %1138 = vmatprep.subr.mxu0 0.0
  %1139 = vmatpush1.msra.mxu0 0.0
  %1140 = vmatprep.subr.mxu0 0.0
  %1141 = vmatpush1.msra.mxu0 0.0
  %1142 = vmatprep.subr.mxu0 0.0
  %1143 = vmatpush1.msra.mxu0 0.0
  %1144 = vmatprep.subr.mxu0 0.0
  %1145 = vmatpush1.msra.mxu0 0.0
  %1146 = vmatprep.subr.mxu0 0.0
  %1147 = vmatpush1.msra.mxu0 0.0
  %1148 = vmatprep.subr.mxu0 0.0
  %1149 = vmatpush1.msra.mxu0 0.0
  %1150 = vmatprep.subr.mxu0 0.0
  %1151 = vmatpush1.msra.mxu0 0.0
  %1152 = vmatprep.subr.mxu0 0.0
  %1153 = vmatpush1.msra.mxu0 0.0
  %1154 = vmatprep.subr.mxu0 0.0
  %1155 = vmatpush1.msra.mxu0 0.0
  %1156 = vmatprep.subr.mxu0 0.0
  %1157 = vmatpush1.msra.mxu0 0.0
  %1158 = vmatprep.mubr.f32.mxu0 0.0
  %1159 = vmatmul.mubr.f32.gmra.mrb[0].mxu0 %v1092
  %v1160 = vpop.f32.mrb[0].mxu0
  %v1161 = vadd.f32 0.0, %v1160
  %v1162 = vpop.f32.mrb[0].mxu0
  %1163 = vdwg.mxu0
  %1164 = vst.msk [vmem:[%s3 + $0x18] sm:$0xff] %vm497, %v1161
  %1166 = vrot.lane.b32.xlu0 %v488, 104
  %v1167 = vpop.permute.xlu0 %1166
  %1168 = vrot.lane.b32.xlu0 %v488, 72
  %v1169 = vpop.permute.xlu0 %1168
  %v1170 = vsel %vm497, %v1167, 0
  %v1172 = vsel %vm497, %v1169, 0
  %1174 = vmatprep.subr.mxu0 0.0
  %1175 = vmatpush1.xpose.msra.mxu0 %v1172
  %1176 = vmatprep.subr.mxu0 0.0
  %1177 = vmatpush1.xpose.msra.mxu0 0.0
  %1178 = vmatprep.subr.mxu0 0.0
  %1179 = vmatpush1.xpose.msra.mxu0 0.0
  %1180 = vmatprep.subr.mxu0 0.0
  %1181 = vmatpush1.xpose.msra.mxu0 0.0
  %1182 = vmatprep.subr.mxu0 0.0
  %1183 = vmatpush1.xpose.msra.mxu0 0.0
  %1184 = vmatprep.subr.mxu0 0.0
  %1185 = vmatpush1.xpose.msra.mxu0 0.0
  %1186 = vmatprep.subr.mxu0 0.0
  %1187 = vmatpush1.xpose.msra.mxu0 0.0
  %1188 = vmatprep.subr.mxu0 0.0
  %1189 = vmatpush1.xpose.msra.mxu0 0.0
  %1190 = vmatprep.subr.mxu0 0.0
  %1191 = vmatpush1.xpose.msra.mxu0 0.0
  %1192 = vmatprep.subr.mxu0 0.0
  %1193 = vmatpush1.xpose.msra.mxu0 0.0
  %1194 = vmatprep.subr.mxu0 0.0
  %1195 = vmatpush1.xpose.msra.mxu0 0.0
  %1196 = vmatprep.subr.mxu0 0.0
  %1197 = vmatpush1.xpose.msra.mxu0 0.0
  %1198 = vmatprep.subr.mxu0 0.0
  %1199 = vmatpush1.xpose.msra.mxu0 0.0
  %1200 = vmatprep.subr.mxu0 0.0
  %1201 = vmatpush1.xpose.msra.mxu0 0.0
  %1202 = vmatprep.subr.mxu0 0.0
  %1203 = vmatpush1.xpose.msra.mxu0 0.0
  %1204 = vmatprep.subr.mxu0 0.0
  %1205 = vmatpush1.xpose.msra.mxu0 0.0
  %1206 = vmatprep.subr.mxu0 0.0
  %1207 = vmatpush1.xpose.msra.mxu0 0.0
  %1208 = vmatprep.subr.mxu0 0.0
  %1209 = vmatpush1.xpose.msra.mxu0 0.0
  %1210 = vmatprep.subr.mxu0 0.0
  %1211 = vmatpush1.xpose.msra.mxu0 0.0
  %1212 = vmatprep.subr.mxu0 0.0
  %1213 = vmatpush1.xpose.msra.mxu0 0.0
  %1214 = vmatprep.subr.mxu0 0.0
  %1215 = vmatpush1.xpose.msra.mxu0 0.0
  %1216 = vmatprep.subr.mxu0 0.0
  %1217 = vmatpush1.xpose.msra.mxu0 0.0
  %1218 = vmatprep.subr.mxu0 0.0
  %1219 = vmatpush1.xpose.msra.mxu0 0.0
  %1220 = vmatprep.subr.mxu0 0.0
  %1221 = vmatpush1.xpose.msra.mxu0 0.0
  %1222 = vmatprep.subr.mxu0 0.0
  %1223 = vmatpush1.xpose.msra.mxu0 0.0
  %1224 = vmatprep.subr.mxu0 0.0
  %1225 = vmatpush1.xpose.msra.mxu0 0.0
  %1226 = vmatprep.subr.mxu0 0.0
  %1227 = vmatpush1.xpose.msra.mxu0 0.0
  %1228 = vmatprep.subr.mxu0 0.0
  %1229 = vmatpush1.xpose.msra.mxu0 0.0
  %1230 = vmatprep.subr.mxu0 0.0
  %1231 = vmatpush1.xpose.msra.mxu0 0.0
  %1232 = vmatprep.subr.mxu0 0.0
  %1233 = vmatpush1.xpose.msra.mxu0 0.0
  %1234 = vmatprep.subr.mxu0 0.0
  %1235 = vmatpush1.xpose.msra.mxu0 0.0
  %1236 = vmatprep.subr.mxu0 0.0
  %1237 = vmatpush1.xpose.msra.mxu0 0.0
  %1238 = vmatprep.mubr.f32.mxu0 0.0
  %1239 = vmatmul.mubr.f32.gmra.mrb[0].mxu0 %v1170
  %v1240 = vpop.f32.mrb[0].mxu0
  %v1241 = vadd.f32 0.0, %v1240
  %v1242 = vpop.f32.mrb[0].mxu0
  %1243 = vdwg.mxu0
  %v1244 = vmul.f32 %v1241, 0.17677669
  %v1245 = vsel %vm497, %v1244, -inf
  %1246 = vmax.xlane.f32.xlu0 %v1245
  %v1247 = vpop.xlane.xlu0 %1246
  %v1248 = vsub.f32 %v1244, %v1247
  %v1249 = vmul.f32 %v1248, 1.442695
  %v1250 = vpow.pop %v1249
  %v1251 = vsel %vm497, %v1250, 0.0
  %1252 = vadd.xlane.f32.xlu0 %v1251
  %v1253 = vpop.xlane.xlu0 %1252
  %v1254 = vrcp.pop %v1253
  %v1255 = vmul.f32 %v1250, %v1254
  %1256 = vrot.lane.b32.xlu0 %v488, 40
  %v1257 = vpop.permute.xlu0 %1256
  %v1260 = vsel %vm497, %v1255, 0
  %1262 = vmatprep.subr.mxu0 0.0
  %1263 = vmatpush1.msra.mxu0 %v1257
  %1264 = vmatprep.subr.mxu0 0.0
  %1265 = vmatpush1.msra.mxu0 0.0
  %1266 = vmatprep.subr.mxu0 0.0
  %1267 = vmatpush1.msra.mxu0 0.0
  %1268 = vmatprep.subr.mxu0 0.0
  %1269 = vmatpush1.msra.mxu0 0.0
  %1270 = vmatprep.subr.mxu0 0.0
  %1271 = vmatpush1.msra.mxu0 0.0
  %1272 = vmatprep.subr.mxu0 0.0
  %1273 = vmatpush1.msra.mxu0 0.0
  %1274 = vmatprep.subr.mxu0 0.0
  %1275 = vmatpush1.msra.mxu0 0.0
  %1276 = vmatprep.subr.mxu0 0.0
  %1277 = vmatpush1.msra.mxu0 0.0
  %1278 = vmatprep.subr.mxu0 0.0
  %1279 = vmatpush1.msra.mxu0 0.0
  %1280 = vmatprep.subr.mxu0 0.0
  %1281 = vmatpush1.msra.mxu0 0.0
  %1282 = vmatprep.subr.mxu0 0.0
  %1283 = vmatpush1.msra.mxu0 0.0
  %1284 = vmatprep.subr.mxu0 0.0
  %1285 = vmatpush1.msra.mxu0 0.0
  %1286 = vmatprep.subr.mxu0 0.0
  %1287 = vmatpush1.msra.mxu0 0.0
  %1288 = vmatprep.subr.mxu0 0.0
  %1289 = vmatpush1.msra.mxu0 0.0
  %1290 = vmatprep.subr.mxu0 0.0
  %1291 = vmatpush1.msra.mxu0 0.0
  %1292 = vmatprep.subr.mxu0 0.0
  %1293 = vmatpush1.msra.mxu0 0.0
  %1294 = vmatprep.subr.mxu0 0.0
  %1295 = vmatpush1.msra.mxu0 0.0
  %1296 = vmatprep.subr.mxu0 0.0
  %1297 = vmatpush1.msra.mxu0 0.0
  %1298 = vmatprep.subr.mxu0 0.0
  %1299 = vmatpush1.msra.mxu0 0.0
  %1300 = vmatprep.subr.mxu0 0.0
  %1301 = vmatpush1.msra.mxu0 0.0
  %1302 = vmatprep.subr.mxu0 0.0
  %1303 = vmatpush1.msra.mxu0 0.0
  %1304 = vmatprep.subr.mxu0 0.0
  %1305 = vmatpush1.msra.mxu0 0.0
  %1306 = vmatprep.subr.mxu0 0.0
  %1307 = vmatpush1.msra.mxu0 0.0
  %1308 = vmatprep.subr.mxu0 0.0
  %1309 = vmatpush1.msra.mxu0 0.0
  %1310 = vmatprep.subr.mxu0 0.0
  %1311 = vmatpush1.msra.mxu0 0.0
  %1312 = vmatprep.subr.mxu0 0.0
  %1313 = vmatpush1.msra.mxu0 0.0
  %1314 = vmatprep.subr.mxu0 0.0
  %1315 = vmatpush1.msra.mxu0 0.0
  %1316 = vmatprep.subr.mxu0 0.0
  %1317 = vmatpush1.msra.mxu0 0.0
  %1318 = vmatprep.subr.mxu0 0.0
  %1319 = vmatpush1.msra.mxu0 0.0
  %1320 = vmatprep.subr.mxu0 0.0
  %1321 = vmatpush1.msra.mxu0 0.0
  %1322 = vmatprep.subr.mxu0 0.0
  %1323 = vmatpush1.msra.mxu0 0.0
  %1324 = vmatprep.subr.mxu0 0.0
  %1325 = vmatpush1.msra.mxu0 0.0
  %1326 = vmatprep.mubr.f32.mxu0 0.0
  %1327 = vmatmul.mubr.f32.gmra.mrb[0].mxu0 %v1260
  %v1328 = vpop.f32.mrb[0].mxu0
  %v1329 = vadd.f32 0.0, %v1328
  %v1330 = vpop.f32.mrb[0].mxu0
  %1331 = vdwg.mxu0
  %1332 = vst.msk [vmem:[%s3 + $0x20] sm:$0xff] %vm497, %v1329
  %1334 = vrot.lane.b32.xlu0 %v489, 104
  %v1335 = vpop.permute.xlu0 %1334
  %1336 = vrot.lane.b32.xlu0 %v489, 72
  %v1337 = vpop.permute.xlu0 %1336
  %v1338 = vsel %vm497, %v1335, 0
  %v1340 = vsel %vm497, %v1337, 0
  %1342 = vmatprep.subr.mxu0 0.0
  %1343 = vmatpush1.xpose.msra.mxu0 %v1340
  %1344 = vmatprep.subr.mxu0 0.0
  %1345 = vmatpush1.xpose.msra.mxu0 0.0
  %1346 = vmatprep.subr.mxu0 0.0
  %1347 = vmatpush1.xpose.msra.mxu0 0.0
  %1348 = vmatprep.subr.mxu0 0.0
  %1349 = vmatpush1.xpose.msra.mxu0 0.0
  %1350 = vmatprep.subr.mxu0 0.0
  %1351 = vmatpush1.xpose.msra.mxu0 0.0
  %1352 = vmatprep.subr.mxu0 0.0
  %1353 = vmatpush1.xpose.msra.mxu0 0.0
  %1354 = vmatprep.subr.mxu0 0.0
  %1355 = vmatpush1.xpose.msra.mxu0 0.0
  %1356 = vmatprep.subr.mxu0 0.0
  %1357 = vmatpush1.xpose.msra.mxu0 0.0
  %1358 = vmatprep.subr.mxu0 0.0
  %1359 = vmatpush1.xpose.msra.mxu0 0.0
  %1360 = vmatprep.subr.mxu0 0.0
  %1361 = vmatpush1.xpose.msra.mxu0 0.0
  %1362 = vmatprep.subr.mxu0 0.0
  %1363 = vmatpush1.xpose.msra.mxu0 0.0
  %1364 = vmatprep.subr.mxu0 0.0
  %1365 = vmatpush1.xpose.msra.mxu0 0.0
  %1366 = vmatprep.subr.mxu0 0.0
  %1367 = vmatpush1.xpose.msra.mxu0 0.0
  %1368 = vmatprep.subr.mxu0 0.0
  %1369 = vmatpush1.xpose.msra.mxu0 0.0
  %1370 = vmatprep.subr.mxu0 0.0
  %1371 = vmatpush1.xpose.msra.mxu0 0.0
  %1372 = vmatprep.subr.mxu0 0.0
  %1373 = vmatpush1.xpose.msra.mxu0 0.0
  %1374 = vmatprep.subr.mxu0 0.0
  %1375 = vmatpush1.xpose.msra.mxu0 0.0
  %1376 = vmatprep.subr.mxu0 0.0
  %1377 = vmatpush1.xpose.msra.mxu0 0.0
  %1378 = vmatprep.subr.mxu0 0.0
  %1379 = vmatpush1.xpose.msra.mxu0 0.0
  %1380 = vmatprep.subr.mxu0 0.0
  %1381 = vmatpush1.xpose.msra.mxu0 0.0
  %1382 = vmatprep.subr.mxu0 0.0
  %1383 = vmatpush1.xpose.msra.mxu0 0.0
  %1384 = vmatprep.subr.mxu0 0.0
  %1385 = vmatpush1.xpose.msra.mxu0 0.0
  %1386 = vmatprep.subr.mxu0 0.0
  %1387 = vmatpush1.xpose.msra.mxu0 0.0
  %1388 = vmatprep.subr.mxu0 0.0
  %1389 = vmatpush1.xpose.msra.mxu0 0.0
  %1390 = vmatprep.subr.mxu0 0.0
  %1391 = vmatpush1.xpose.msra.mxu0 0.0
  %1392 = vmatprep.subr.mxu0 0.0
  %1393 = vmatpush1.xpose.msra.mxu0 0.0
  %1394 = vmatprep.subr.mxu0 0.0
  %1395 = vmatpush1.xpose.msra.mxu0 0.0
  %1396 = vmatprep.subr.mxu0 0.0
  %1397 = vmatpush1.xpose.msra.mxu0 0.0
  %1398 = vmatprep.subr.mxu0 0.0
  %1399 = vmatpush1.xpose.msra.mxu0 0.0
  %1400 = vmatprep.subr.mxu0 0.0
  %1401 = vmatpush1.xpose.msra.mxu0 0.0
  %1402 = vmatprep.subr.mxu0 0.0
  %1403 = vmatpush1.xpose.msra.mxu0 0.0
  %1404 = vmatprep.subr.mxu0 0.0
  %1405 = vmatpush1.xpose.msra.mxu0 0.0
  %1406 = vmatprep.mubr.f32.mxu0 0.0
  %1407 = vmatmul.mubr.f32.gmra.mrb[0].mxu0 %v1338
  %v1408 = vpop.f32.mrb[0].mxu0
  %v1409 = vadd.f32 0.0, %v1408
  %v1410 = vpop.f32.mrb[0].mxu0
  %1411 = vdwg.mxu0
  %v1412 = vmul.f32 %v1409, 0.17677669
  %v1413 = vsel %vm497, %v1412, -inf
  %1414 = vmax.xlane.f32.xlu0 %v1413
  %v1415 = vpop.xlane.xlu0 %1414
  %v1416 = vsub.f32 %v1412, %v1415
  %v1417 = vmul.f32 %v1416, 1.442695
  %v1418 = vpow.pop %v1417
  %v1419 = vsel %vm497, %v1418, 0.0
  %1420 = vadd.xlane.f32.xlu0 %v1419
  %v1421 = vpop.xlane.xlu0 %1420
  %v1422 = vrcp.pop %v1421
  %v1423 = vmul.f32 %v1418, %v1422
  %1424 = vrot.lane.b32.xlu0 %v489, 40
  %v1425 = vpop.permute.xlu0 %1424
  %v1428 = vsel %vm497, %v1423, 0
  %1430 = vmatprep.subr.mxu0 0.0
  %1431 = vmatpush1.msra.mxu0 %v1425
  %1432 = vmatprep.subr.mxu0 0.0
  %1433 = vmatpush1.msra.mxu0 0.0
  %1434 = vmatprep.subr.mxu0 0.0
  %1435 = vmatpush1.msra.mxu0 0.0
  %1436 = vmatprep.subr.mxu0 0.0
  %1437 = vmatpush1.msra.mxu0 0.0
  %1438 = vmatprep.subr.mxu0 0.0
  %1439 = vmatpush1.msra.mxu0 0.0
  %1440 = vmatprep.subr.mxu0 0.0
  %1441 = vmatpush1.msra.mxu0 0.0
  %1442 = vmatprep.subr.mxu0 0.0
  %1443 = vmatpush1.msra.mxu0 0.0
  %1444 = vmatprep.subr.mxu0 0.0
  %1445 = vmatpush1.msra.mxu0 0.0
  %1446 = vmatprep.subr.mxu0 0.0
  %1447 = vmatpush1.msra.mxu0 0.0
  %1448 = vmatprep.subr.mxu0 0.0
  %1449 = vmatpush1.msra.mxu0 0.0
  %1450 = vmatprep.subr.mxu0 0.0
  %1451 = vmatpush1.msra.mxu0 0.0
  %1452 = vmatprep.subr.mxu0 0.0
  %1453 = vmatpush1.msra.mxu0 0.0
  %1454 = vmatprep.subr.mxu0 0.0
  %1455 = vmatpush1.msra.mxu0 0.0
  %1456 = vmatprep.subr.mxu0 0.0
  %1457 = vmatpush1.msra.mxu0 0.0
  %1458 = vmatprep.subr.mxu0 0.0
  %1459 = vmatpush1.msra.mxu0 0.0
  %1460 = vmatprep.subr.mxu0 0.0
  %1461 = vmatpush1.msra.mxu0 0.0
  %1462 = vmatprep.subr.mxu0 0.0
  %1463 = vmatpush1.msra.mxu0 0.0
  %1464 = vmatprep.subr.mxu0 0.0
  %1465 = vmatpush1.msra.mxu0 0.0
  %1466 = vmatprep.subr.mxu0 0.0
  %1467 = vmatpush1.msra.mxu0 0.0
  %1468 = vmatprep.subr.mxu0 0.0
  %1469 = vmatpush1.msra.mxu0 0.0
  %1470 = vmatprep.subr.mxu0 0.0
  %1471 = vmatpush1.msra.mxu0 0.0
  %1472 = vmatprep.subr.mxu0 0.0
  %1473 = vmatpush1.msra.mxu0 0.0
  %1474 = vmatprep.subr.mxu0 0.0
  %1475 = vmatpush1.msra.mxu0 0.0
  %1476 = vmatprep.subr.mxu0 0.0
  %1477 = vmatpush1.msra.mxu0 0.0
  %1478 = vmatprep.subr.mxu0 0.0
  %1479 = vmatpush1.msra.mxu0 0.0
  %1480 = vmatprep.subr.mxu0 0.0
  %1481 = vmatpush1.msra.mxu0 0.0
  %1482 = vmatprep.subr.mxu0 0.0
  %1483 = vmatpush1.msra.mxu0 0.0
  %1484 = vmatprep.subr.mxu0 0.0
  %1485 = vmatpush1.msra.mxu0 0.0
  %1486 = vmatprep.subr.mxu0 0.0
  %1487 = vmatpush1.msra.mxu0 0.0
  %1488 = vmatprep.subr.mxu0 0.0
  %1489 = vmatpush1.msra.mxu0 0.0
  %1490 = vmatprep.subr.mxu0 0.0
  %1491 = vmatpush1.msra.mxu0 0.0
  %1492 = vmatprep.subr.mxu0 0.0
  %1493 = vmatpush1.msra.mxu0 0.0
  %1494 = vmatprep.mubr.f32.mxu0 0.0
  %1495 = vmatmul.mubr.f32.gmra.mrb[0].mxu0 %v1428
  %v1496 = vpop.f32.mrb[0].mxu0
  %v1497 = vadd.f32 0.0, %v1496
  %v1498 = vpop.f32.mrb[0].mxu0
  %1499 = vdwg.mxu0
  %1500 = vst.msk [vmem:[%s3 + $0x28] sm:$0xff] %vm497, %v1497
  %1502 = vrot.lane.b32.xlu0 %v490, 104
  %v1503 = vpop.permute.xlu0 %1502
  %1504 = vrot.lane.b32.xlu0 %v490, 72
  %v1505 = vpop.permute.xlu0 %1504
  %v1506 = vsel %vm497, %v1503, 0
  %v1508 = vsel %vm497, %v1505, 0
  %1510 = vmatprep.subr.mxu0 0.0
  %1511 = vmatpush1.xpose.msra.mxu0 %v1508
  %1512 = vmatprep.subr.mxu0 0.0
  %1513 = vmatpush1.xpose.msra.mxu0 0.0
  %1514 = vmatprep.subr.mxu0 0.0
  %1515 = vmatpush1.xpose.msra.mxu0 0.0
  %1516 = vmatprep.subr.mxu0 0.0
  %1517 = vmatpush1.xpose.msra.mxu0 0.0
  %1518 = vmatprep.subr.mxu0 0.0
  %1519 = vmatpush1.xpose.msra.mxu0 0.0
  %1520 = vmatprep.subr.mxu0 0.0
  %1521 = vmatpush1.xpose.msra.mxu0 0.0
  %1522 = vmatprep.subr.mxu0 0.0
  %1523 = vmatpush1.xpose.msra.mxu0 0.0
  %1524 = vmatprep.subr.mxu0 0.0
  %1525 = vmatpush1.xpose.msra.mxu0 0.0
  %1526 = vmatprep.subr.mxu0 0.0
  %1527 = vmatpush1.xpose.msra.mxu0 0.0
  %1528 = vmatprep.subr.mxu0 0.0
  %1529 = vmatpush1.xpose.msra.mxu0 0.0
  %1530 = vmatprep.subr.mxu0 0.0
  %1531 = vmatpush1.xpose.msra.mxu0 0.0
  %1532 = vmatprep.subr.mxu0 0.0
  %1533 = vmatpush1.xpose.msra.mxu0 0.0
  %1534 = vmatprep.subr.mxu0 0.0
  %1535 = vmatpush1.xpose.msra.mxu0 0.0
  %1536 = vmatprep.subr.mxu0 0.0
  %1537 = vmatpush1.xpose.msra.mxu0 0.0
  %1538 = vmatprep.subr.mxu0 0.0
  %1539 = vmatpush1.xpose.msra.mxu0 0.0
  %1540 = vmatprep.subr.mxu0 0.0
  %1541 = vmatpush1.xpose.msra.mxu0 0.0
  %1542 = vmatprep.subr.mxu0 0.0
  %1543 = vmatpush1.xpose.msra.mxu0 0.0
  %1544 = vmatprep.subr.mxu0 0.0
  %1545 = vmatpush1.xpose.msra.mxu0 0.0
  %1546 = vmatprep.subr.mxu0 0.0
  %1547 = vmatpush1.xpose.msra.mxu0 0.0
  %1548 = vmatprep.subr.mxu0 0.0
  %1549 = vmatpush1.xpose.msra.mxu0 0.0
  %1550 = vmatprep.subr.mxu0 0.0
  %1551 = vmatpush1.xpose.msra.mxu0 0.0
  %1552 = vmatprep.subr.mxu0 0.0
  %1553 = vmatpush1.xpose.msra.mxu0 0.0
  %1554 = vmatprep.subr.mxu0 0.0
  %1555 = vmatpush1.xpose.msra.mxu0 0.0
  %1556 = vmatprep.subr.mxu0 0.0
  %1557 = vmatpush1.xpose.msra.mxu0 0.0
  %1558 = vmatprep.subr.mxu0 0.0
  %1559 = vmatpush1.xpose.msra.mxu0 0.0
  %1560 = vmatprep.subr.mxu0 0.0
  %1561 = vmatpush1.xpose.msra.mxu0 0.0
  %1562 = vmatprep.subr.mxu0 0.0
  %1563 = vmatpush1.xpose.msra.mxu0 0.0
  %1564 = vmatprep.subr.mxu0 0.0
  %1565 = vmatpush1.xpose.msra.mxu0 0.0
  %1566 = vmatprep.subr.mxu0 0.0
  %1567 = vmatpush1.xpose.msra.mxu0 0.0
  %1568 = vmatprep.subr.mxu0 0.0
  %1569 = vmatpush1.xpose.msra.mxu0 0.0
  %1570 = vmatprep.subr.mxu0 0.0
  %1571 = vmatpush1.xpose.msra.mxu0 0.0
  %1572 = vmatprep.subr.mxu0 0.0
  %1573 = vmatpush1.xpose.msra.mxu0 0.0
  %1574 = vmatprep.mubr.f32.mxu0 0.0
  %1575 = vmatmul.mubr.f32.gmra.mrb[0].mxu0 %v1506
  %v1576 = vpop.f32.mrb[0].mxu0
  %v1577 = vadd.f32 0.0, %v1576
  %v1578 = vpop.f32.mrb[0].mxu0
  %1579 = vdwg.mxu0
  %v1580 = vmul.f32 %v1577, 0.17677669
  %v1581 = vsel %vm497, %v1580, -inf
  %1582 = vmax.xlane.f32.xlu0 %v1581
  %v1583 = vpop.xlane.xlu0 %1582
  %v1584 = vsub.f32 %v1580, %v1583
  %v1585 = vmul.f32 %v1584, 1.442695
  %v1586 = vpow.pop %v1585
  %v1587 = vsel %vm497, %v1586, 0.0
  %1588 = vadd.xlane.f32.xlu0 %v1587
  %v1589 = vpop.xlane.xlu0 %1588
  %v1590 = vrcp.pop %v1589
  %v1591 = vmul.f32 %v1586, %v1590
  %1592 = vrot.lane.b32.xlu0 %v490, 40
  %v1593 = vpop.permute.xlu0 %1592
  %v1596 = vsel %vm497, %v1591, 0
  %1598 = vmatprep.subr.mxu0 0.0
  %1599 = vmatpush1.msra.mxu0 %v1593
  %1600 = vmatprep.subr.mxu0 0.0
  %1601 = vmatpush1.msra.mxu0 0.0
  %1602 = vmatprep.subr.mxu0 0.0
  %1603 = vmatpush1.msra.mxu0 0.0
  %1604 = vmatprep.subr.mxu0 0.0
  %1605 = vmatpush1.msra.mxu0 0.0
  %1606 = vmatprep.subr.mxu0 0.0
  %1607 = vmatpush1.msra.mxu0 0.0
  %1608 = vmatprep.subr.mxu0 0.0
  %1609 = vmatpush1.msra.mxu0 0.0
  %1610 = vmatprep.subr.mxu0 0.0
  %1611 = vmatpush1.msra.mxu0 0.0
  %1612 = vmatprep.subr.mxu0 0.0
  %1613 = vmatpush1.msra.mxu0 0.0
  %1614 = vmatprep.subr.mxu0 0.0
  %1615 = vmatpush1.msra.mxu0 0.0
  %1616 = vmatprep.subr.mxu0 0.0
  %1617 = vmatpush1.msra.mxu0 0.0
  %1618 = vmatprep.subr.mxu0 0.0
  %1619 = vmatpush1.msra.mxu0 0.0
  %1620 = vmatprep.subr.mxu0 0.0
  %1621 = vmatpush1.msra.mxu0 0.0
  %1622 = vmatprep.subr.mxu0 0.0
  %1623 = vmatpush1.msra.mxu0 0.0
  %1624 = vmatprep.subr.mxu0 0.0
  %1625 = vmatpush1.msra.mxu0 0.0
  %1626 = vmatprep.subr.mxu0 0.0
  %1627 = vmatpush1.msra.mxu0 0.0
  %1628 = vmatprep.subr.mxu0 0.0
  %1629 = vmatpush1.msra.mxu0 0.0
  %1630 = vmatprep.subr.mxu0 0.0
  %1631 = vmatpush1.msra.mxu0 0.0
  %1632 = vmatprep.subr.mxu0 0.0
  %1633 = vmatpush1.msra.mxu0 0.0
  %1634 = vmatprep.subr.mxu0 0.0
  %1635 = vmatpush1.msra.mxu0 0.0
  %1636 = vmatprep.subr.mxu0 0.0
  %1637 = vmatpush1.msra.mxu0 0.0
  %1638 = vmatprep.subr.mxu0 0.0
  %1639 = vmatpush1.msra.mxu0 0.0
  %1640 = vmatprep.subr.mxu0 0.0
  %1641 = vmatpush1.msra.mxu0 0.0
  %1642 = vmatprep.subr.mxu0 0.0
  %1643 = vmatpush1.msra.mxu0 0.0
  %1644 = vmatprep.subr.mxu0 0.0
  %1645 = vmatpush1.msra.mxu0 0.0
  %1646 = vmatprep.subr.mxu0 0.0
  %1647 = vmatpush1.msra.mxu0 0.0
  %1648 = vmatprep.subr.mxu0 0.0
  %1649 = vmatpush1.msra.mxu0 0.0
  %1650 = vmatprep.subr.mxu0 0.0
  %1651 = vmatpush1.msra.mxu0 0.0
  %1652 = vmatprep.subr.mxu0 0.0
  %1653 = vmatpush1.msra.mxu0 0.0
  %1654 = vmatprep.subr.mxu0 0.0
  %1655 = vmatpush1.msra.mxu0 0.0
  %1656 = vmatprep.subr.mxu0 0.0
  %1657 = vmatpush1.msra.mxu0 0.0
  %1658 = vmatprep.subr.mxu0 0.0
  %1659 = vmatpush1.msra.mxu0 0.0
  %1660 = vmatprep.subr.mxu0 0.0
  %1661 = vmatpush1.msra.mxu0 0.0
  %1662 = vmatprep.mubr.f32.mxu0 0.0
  %1663 = vmatmul.mubr.f32.gmra.mrb[0].mxu0 %v1596
  %v1664 = vpop.f32.mrb[0].mxu0
  %v1665 = vadd.f32 0.0, %v1664
  %v1666 = vpop.f32.mrb[0].mxu0
  %1667 = vdwg.mxu0
  %1668 = vst.msk [vmem:[%s3 + $0x30] sm:$0xff] %vm497, %v1665
  %1670 = vrot.lane.b32.xlu0 %v491, 104
  %v1671 = vpop.permute.xlu0 %1670
  %1672 = vrot.lane.b32.xlu0 %v491, 72
  %v1673 = vpop.permute.xlu0 %1672
  %v1674 = vsel %vm497, %v1671, 0
  %v1676 = vsel %vm497, %v1673, 0
  %1678 = vmatprep.subr.mxu0 0.0
  %1679 = vmatpush1.xpose.msra.mxu0 %v1676
  %1680 = vmatprep.subr.mxu0 0.0
  %1681 = vmatpush1.xpose.msra.mxu0 0.0
  %1682 = vmatprep.subr.mxu0 0.0
  %1683 = vmatpush1.xpose.msra.mxu0 0.0
  %1684 = vmatprep.subr.mxu0 0.0
  %1685 = vmatpush1.xpose.msra.mxu0 0.0
  %1686 = vmatprep.subr.mxu0 0.0
  %1687 = vmatpush1.xpose.msra.mxu0 0.0
  %1688 = vmatprep.subr.mxu0 0.0
  %1689 = vmatpush1.xpose.msra.mxu0 0.0
  %1690 = vmatprep.subr.mxu0 0.0
  %1691 = vmatpush1.xpose.msra.mxu0 0.0
  %1692 = vmatprep.subr.mxu0 0.0
  %1693 = vmatpush1.xpose.msra.mxu0 0.0
  %1694 = vmatprep.subr.mxu0 0.0
  %1695 = vmatpush1.xpose.msra.mxu0 0.0
  %1696 = vmatprep.subr.mxu0 0.0
  %1697 = vmatpush1.xpose.msra.mxu0 0.0
  %1698 = vmatprep.subr.mxu0 0.0
  %1699 = vmatpush1.xpose.msra.mxu0 0.0
  %1700 = vmatprep.subr.mxu0 0.0
  %1701 = vmatpush1.xpose.msra.mxu0 0.0
  %1702 = vmatprep.subr.mxu0 0.0
  %1703 = vmatpush1.xpose.msra.mxu0 0.0
  %1704 = vmatprep.subr.mxu0 0.0
  %1705 = vmatpush1.xpose.msra.mxu0 0.0
  %1706 = vmatprep.subr.mxu0 0.0
  %1707 = vmatpush1.xpose.msra.mxu0 0.0
  %1708 = vmatprep.subr.mxu0 0.0
  %1709 = vmatpush1.xpose.msra.mxu0 0.0
  %1710 = vmatprep.subr.mxu0 0.0
  %1711 = vmatpush1.xpose.msra.mxu0 0.0
  %1712 = vmatprep.subr.mxu0 0.0
  %1713 = vmatpush1.xpose.msra.mxu0 0.0
  %1714 = vmatprep.subr.mxu0 0.0
  %1715 = vmatpush1.xpose.msra.mxu0 0.0
  %1716 = vmatprep.subr.mxu0 0.0
  %1717 = vmatpush1.xpose.msra.mxu0 0.0
  %1718 = vmatprep.subr.mxu0 0.0
  %1719 = vmatpush1.xpose.msra.mxu0 0.0
  %1720 = vmatprep.subr.mxu0 0.0
  %1721 = vmatpush1.xpose.msra.mxu0 0.0
  %1722 = vmatprep.subr.mxu0 0.0
  %1723 = vmatpush1.xpose.msra.mxu0 0.0
  %1724 = vmatprep.subr.mxu0 0.0
  %1725 = vmatpush1.xpose.msra.mxu0 0.0
  %1726 = vmatprep.subr.mxu0 0.0
  %1727 = vmatpush1.xpose.msra.mxu0 0.0
  %1728 = vmatprep.subr.mxu0 0.0
  %1729 = vmatpush1.xpose.msra.mxu0 0.0
  %1730 = vmatprep.subr.mxu0 0.0
  %1731 = vmatpush1.xpose.msra.mxu0 0.0
  %1732 = vmatprep.subr.mxu0 0.0
  %1733 = vmatpush1.xpose.msra.mxu0 0.0
  %1734 = vmatprep.subr.mxu0 0.0
  %1735 = vmatpush1.xpose.msra.mxu0 0.0
  %1736 = vmatprep.subr.mxu0 0.0
  %1737 = vmatpush1.xpose.msra.mxu0 0.0
  %1738 = vmatprep.subr.mxu0 0.0
  %1739 = vmatpush1.xpose.msra.mxu0 0.0
  %1740 = vmatprep.subr.mxu0 0.0
  %1741 = vmatpush1.xpose.msra.mxu0 0.0
  %1742 = vmatprep.mubr.f32.mxu0 0.0
  %1743 = vmatmul.mubr.f32.gmra.mrb[0].mxu0 %v1674
  %v1744 = vpop.f32.mrb[0].mxu0
  %v1745 = vadd.f32 0.0, %v1744
  %v1746 = vpop.f32.mrb[0].mxu0
  %1747 = vdwg.mxu0
  %v1748 = vmul.f32 %v1745, 0.17677669
  %v1749 = vsel %vm497, %v1748, -inf
  %1750 = vmax.xlane.f32.xlu0 %v1749
  %v1751 = vpop.xlane.xlu0 %1750
  %v1752 = vsub.f32 %v1748, %v1751
  %v1753 = vmul.f32 %v1752, 1.442695
  %v1754 = vpow.pop %v1753
  %v1755 = vsel %vm497, %v1754, 0.0
  %1756 = vadd.xlane.f32.xlu0 %v1755
  %v1757 = vpop.xlane.xlu0 %1756
  %v1758 = vrcp.pop %v1757
  %v1759 = vmul.f32 %v1754, %v1758
  %1760 = vrot.lane.b32.xlu0 %v491, 40
  %v1761 = vpop.permute.xlu0 %1760
  %v1764 = vsel %vm497, %v1759, 0
  %1766 = vmatprep.subr.mxu0 0.0
  %1767 = vmatpush1.msra.mxu0 %v1761
  %1768 = vmatprep.subr.mxu0 0.0
  %1769 = vmatpush1.msra.mxu0 0.0
  %1770 = vmatprep.subr.mxu0 0.0
  %1771 = vmatpush1.msra.mxu0 0.0
  %1772 = vmatprep.subr.mxu0 0.0
  %1773 = vmatpush1.msra.mxu0 0.0
  %1774 = vmatprep.subr.mxu0 0.0
  %1775 = vmatpush1.msra.mxu0 0.0
  %1776 = vmatprep.subr.mxu0 0.0
  %1777 = vmatpush1.msra.mxu0 0.0
  %1778 = vmatprep.subr.mxu0 0.0
  %1779 = vmatpush1.msra.mxu0 0.0
  %1780 = vmatprep.subr.mxu0 0.0
  %1781 = vmatpush1.msra.mxu0 0.0
  %1782 = vmatprep.subr.mxu0 0.0
  %1783 = vmatpush1.msra.mxu0 0.0
  %1784 = vmatprep.subr.mxu0 0.0
  %1785 = vmatpush1.msra.mxu0 0.0
  %1786 = vmatprep.subr.mxu0 0.0
  %1787 = vmatpush1.msra.mxu0 0.0
  %1788 = vmatprep.subr.mxu0 0.0
  %1789 = vmatpush1.msra.mxu0 0.0
  %1790 = vmatprep.subr.mxu0 0.0
  %1791 = vmatpush1.msra.mxu0 0.0
  %1792 = vmatprep.subr.mxu0 0.0
  %1793 = vmatpush1.msra.mxu0 0.0
  %1794 = vmatprep.subr.mxu0 0.0
  %1795 = vmatpush1.msra.mxu0 0.0
  %1796 = vmatprep.subr.mxu0 0.0
  %1797 = vmatpush1.msra.mxu0 0.0
  %1798 = vmatprep.subr.mxu0 0.0
  %1799 = vmatpush1.msra.mxu0 0.0
  %1800 = vmatprep.subr.mxu0 0.0
  %1801 = vmatpush1.msra.mxu0 0.0
  %1802 = vmatprep.subr.mxu0 0.0
  %1803 = vmatpush1.msra.mxu0 0.0
  %1804 = vmatprep.subr.mxu0 0.0
  %1805 = vmatpush1.msra.mxu0 0.0
  %1806 = vmatprep.subr.mxu0 0.0
  %1807 = vmatpush1.msra.mxu0 0.0
  %1808 = vmatprep.subr.mxu0 0.0
  %1809 = vmatpush1.msra.mxu0 0.0
  %1810 = vmatprep.subr.mxu0 0.0
  %1811 = vmatpush1.msra.mxu0 0.0
  %1812 = vmatprep.subr.mxu0 0.0
  %1813 = vmatpush1.msra.mxu0 0.0
  %1814 = vmatprep.subr.mxu0 0.0
  %1815 = vmatpush1.msra.mxu0 0.0
  %1816 = vmatprep.subr.mxu0 0.0
  %1817 = vmatpush1.msra.mxu0 0.0
  %1818 = vmatprep.subr.mxu0 0.0
  %1819 = vmatpush1.msra.mxu0 0.0
  %1820 = vmatprep.subr.mxu0 0.0
  %1821 = vmatpush1.msra.mxu0 0.0
  %1822 = vmatprep.subr.mxu0 0.0
  %1823 = vmatpush1.msra.mxu0 0.0
  %1824 = vmatprep.subr.mxu0 0.0
  %1825 = vmatpush1.msra.mxu0 0.0
  %1826 = vmatprep.subr.mxu0 0.0
  %1827 = vmatpush1.msra.mxu0 0.0
  %1828 = vmatprep.subr.mxu0 0.0
  %1829 = vmatpush1.msra.mxu0 0.0
  %1830 = vmatprep.mubr.f32.mxu0 0.0
  %1831 = vmatmul.mubr.f32.gmra.mrb[0].mxu0 %v1764
  %v1832 = vpop.f32.mrb[0].mxu0
  %v1833 = vadd.f32 0.0, %v1832
  %v1834 = vpop.f32.mrb[0].mxu0
  %1835 = vdwg.mxu0
  %1836 = vst.msk [vmem:[%s3 + $0x38] sm:$0xff] %vm497, %v1833
  // Predicated region
  $region14: #{encoder_forward.2} parent=0 // pred_check
    _
  $region15: #{encoder_forward.2} parent=0 // pred_check_branch
    %1838 = sbr.rel (0) target = $region17
  $region16: #{encoder_forward.2} parent=0 // pred_region
    _
  $region17: #{encoder_forward.2} parent=0 // pred_fallthru
    _
  // Predicated region
  $region18: #{encoder_forward.2} parent=0 // pred_check
    _
  $region19: #{encoder_forward.2} parent=0 // pred_check_branch
    %1840 = sbr.rel (0) target = $region21
  $region20: #{encoder_forward.2} parent=0 // pred_region
    _
  $region21: #{encoder_forward.2} parent=0 // pred_fallthru
    _

</llo_original>
